<compile_context>
chip_gen: v7x
topology: tpu7x:2x2x1
jax: 0.10.0
libtpu: 0.0.40
codegen_flags: <defaults>
</compile_context>

<pallas_src>
import functools
import math

import jax
import jax.numpy as jnp
from jax.experimental import pallas as pl
from jax.experimental.pallas import tpu as pltpu


# -----------------------------------------------------------------------------
# Kernel bodies
# -----------------------------------------------------------------------------
def _layer_norm(x, g, b, eps=1e-5):
    mu = jnp.mean(x, axis=-1, keepdims=True)
    var = jnp.mean((x - mu) ** 2, axis=-1, keepdims=True)
    return (x - mu) * jax.lax.rsqrt(var + eps) * g + b


def linear_kernel(x_ref, w_ref, b_ref, y_ref):
    # One row-tile of x times a resident (K, N) weight; bf16 MXU inputs, f32 accum.
    x = x_ref[...].astype(jnp.bfloat16)
    w = w_ref[...].astype(jnp.bfloat16)
    acc = jnp.dot(x, w, preferred_element_type=jnp.float32) + b_ref[...]
    y_ref[...] = acc.astype(y_ref.dtype)


def proj2_kernel(x_ref, wa_ref, ba_ref, wb_ref, bb_ref, y_ref):
    # y = (x @ wa + ba) @ wb + bb   (cross-attn out-proj fused with self-attn QKV proj).
    x = x_ref[...].astype(jnp.bfloat16)
    h = jnp.dot(x, wa_ref[...].astype(jnp.bfloat16),
                preferred_element_type=jnp.float32) + ba_ref[...]
    y = jnp.dot(h.astype(jnp.bfloat16), wb_ref[...].astype(jnp.bfloat16),
                preferred_element_type=jnp.float32) + bb_ref[...]
    y_ref[...] = y.astype(y_ref.dtype)


def attn_core_kernel(q_ref, k_ref, v_ref, o_ref):
    # q_ref: (H, TQ, D); k_ref, v_ref: (H, TK, D) -- all heads of one batch per grid step.
    # q scaling already folded into W_q at init time; softmax kept in f32.
    q = q_ref[...].astype(jnp.bfloat16)
    k = k_ref[...].astype(jnp.bfloat16)
    s = jnp.einsum('hqd,hkd->hqk', q, k, preferred_element_type=jnp.float32)
    s = s - jnp.max(s, axis=-1, keepdims=True)
    p = jnp.exp(s)
    p = p * pl.reciprocal(jnp.sum(p, axis=-1, keepdims=True), approx=True)
    o = jnp.einsum('hqk,hkd->hqd',
                   p.astype(jnp.bfloat16), v_ref[...].astype(jnp.bfloat16),
                   preferred_element_type=jnp.float32)
    o_ref[...] = o.astype(o_ref.dtype)


def out_proj_ffn_kernel(x_ref, wo_ref, bo_ref, w1_ref, b1_ref, w2_ref, b2_ref,
                        ln0_g_ref, ln0_b_ref, ln1_g_ref, ln1_b_ref, y_ref):
    # sa = x @ wo + bo;  h0 = LN0(sa);  y = LN1(h0 + fc2(relu(fc1(h0))))
    sa = jnp.dot(x_ref[...].astype(jnp.bfloat16), wo_ref[...].astype(jnp.bfloat16),
                 preferred_element_type=jnp.float32) + bo_ref[...]
    h0 = _layer_norm(sa, ln0_g_ref[...], ln0_b_ref[...])
    h = jnp.dot(h0.astype(jnp.bfloat16), w1_ref[...].astype(jnp.bfloat16),
                preferred_element_type=jnp.float32) + b1_ref[...]
    h = jnp.maximum(h, 0.0)
    y = jnp.dot(h.astype(jnp.bfloat16), w2_ref[...].astype(jnp.bfloat16),
                preferred_element_type=jnp.float32) + b2_ref[...]
    y = _layer_norm(h0 + y, ln1_g_ref[...], ln1_b_ref[...])
    y_ref[...] = y.astype(y_ref.dtype)


# -----------------------------------------------------------------------------
# pallas_call wrappers
# -----------------------------------------------------------------------------
_PARALLEL_1D = pltpu.CompilerParams(dimension_semantics=("parallel",))
_PARALLEL_2D = pltpu.CompilerParams(dimension_semantics=("parallel", "parallel"))


def _row_tile(rows, max_tile=256):
    # Full array if small (satisfies (8,128) via "equals full dim"), else multiple-of-8
    # tile; Pallas handles the partial last block.
    return rows if rows <= max_tile else max_tile


def _fixed(i):
    return (0, 0)


def pallas_linear(x2, w, b, *, out_dtype=jnp.float32):
    rows, K = x2.shape
    N = w.shape[1]
    tm = _row_tile(rows)
    return pl.pallas_call(
        linear_kernel,
        out_shape=jax.ShapeDtypeStruct((rows, N), out_dtype),
        grid_spec=pltpu.PrefetchScalarGridSpec(
            num_scalar_prefetch=0,
            grid=(pl.cdiv(rows, tm),),
            in_specs=[pl.BlockSpec((tm, K), lambda i: (i, 0)),
                      pl.BlockSpec((K, N), _fixed),
                      pl.BlockSpec((1, N), _fixed)],
            out_specs=pl.BlockSpec((tm, N), lambda i: (i, 0))),
        compiler_params=_PARALLEL_1D,
    )(x2, w, b)


def pallas_proj2(x2, wa, ba, wb, bb, *, out_dtype=jnp.bfloat16):
    rows, K = x2.shape
    N1 = wa.shape[1]
    N2 = wb.shape[1]
    tm = _row_tile(rows)
    return pl.pallas_call(
        proj2_kernel,
        out_shape=jax.ShapeDtypeStruct((rows, N2), out_dtype),
        grid_spec=pltpu.PrefetchScalarGridSpec(
            num_scalar_prefetch=0,
            grid=(pl.cdiv(rows, tm),),
            in_specs=[pl.BlockSpec((tm, K), lambda i: (i, 0)),
                      pl.BlockSpec((K, N1), _fixed),
                      pl.BlockSpec((1, N1), _fixed),
                      pl.BlockSpec((N1, N2), _fixed),
                      pl.BlockSpec((1, N2), _fixed)],
            out_specs=pl.BlockSpec((tm, N2), lambda i: (i, 0))),
        compiler_params=_PARALLEL_1D,
    )(x2, wa, ba, wb, bb)


def pallas_attention_core(qh, kh, vh, num_heads, *, out_dtype=jnp.bfloat16):
    # qh: (B*H, T_q, D); kh, vh: (B*H, T_k, D).  One batch element (all heads) per step.
    BH, TQ_total, D = qh.shape
    TK = kh.shape[1]
    H = num_heads
    B = BH // H
    tq = _row_tile(TQ_total)
    # TODO(synk): for very long key sequences add a kv grid axis with online softmax
    # (flash-style) so the (H, tq, TK) score tile stays bounded; not needed at these sizes.
    return pl.pallas_call(
        attn_core_kernel,
        out_shape=jax.ShapeDtypeStruct((BH, TQ_total, D), out_dtype),
        grid_spec=pltpu.PrefetchScalarGridSpec(
            num_scalar_prefetch=0,
            grid=(B, pl.cdiv(TQ_total, tq)),
            in_specs=[pl.BlockSpec((H, tq, D), lambda b, qi: (b, qi, 0)),
                      pl.BlockSpec((H, TK, D), lambda b, qi: (b, 0, 0)),
                      pl.BlockSpec((H, TK, D), lambda b, qi: (b, 0, 0))],
            out_specs=pl.BlockSpec((H, tq, D), lambda b, qi: (b, qi, 0))),
        compiler_params=_PARALLEL_2D,
    )(qh, kh, vh)


def pallas_out_proj_ffn(x2, wo, bo, p_ffn):
    rows, E = x2.shape
    F_dim = p_ffn['w1'].shape[1]
    tm = _row_tile(rows)
    return pl.pallas_call(
        out_proj_ffn_kernel,
        out_shape=jax.ShapeDtypeStruct((rows, E), jnp.float32),
        grid_spec=pltpu.PrefetchScalarGridSpec(
            num_scalar_prefetch=0,
            grid=(pl.cdiv(rows, tm),),
            in_specs=[pl.BlockSpec((tm, E), lambda i: (i, 0)),
                      pl.BlockSpec((E, E), _fixed),
                      pl.BlockSpec((1, E), _fixed),
                      pl.BlockSpec((E, F_dim), _fixed),
                      pl.BlockSpec((1, F_dim), _fixed),
                      pl.BlockSpec((F_dim, E), _fixed),
                      pl.BlockSpec((1, E), _fixed),
                      pl.BlockSpec((1, E), _fixed),
                      pl.BlockSpec((1, E), _fixed),
                      pl.BlockSpec((1, E), _fixed),
                      pl.BlockSpec((1, E), _fixed)],
            out_specs=pl.BlockSpec((tm, E), lambda i: (i, 0))),
        compiler_params=_PARALLEL_1D,
    )(x2, wo, bo, p_ffn['w1'], p_ffn['b1'], p_ffn['w2'], p_ffn['b2'],
      p_ffn['ln0_g'], p_ffn['ln0_b'], p_ffn['ln1_g'], p_ffn['ln1_b'])


# -----------------------------------------------------------------------------
# Multi-head attention glue (fairseq-style) and MPU forward
# -----------------------------------------------------------------------------
def _split_heads(x2, T, B, H, D):
    # (T*B, E) -> (B*H, T, D); matches torch view(T, B*H, D).transpose(0, 1).
    return x2.reshape(T, B, H, D).transpose(1, 2, 0, 3).reshape(B * H, T, D)


def _merge_heads(oh, T, B, H, D):
    # (B*H, T, D) -> (T*B, E); matches torch transpose(0, 1).view(T, B, E).
    return oh.reshape(B, H, T, D).transpose(2, 0, 1, 3).reshape(T * B, H * D)


def mpu_forward(x_s, x_t, params, num_heads):
    """MPU.forward (eval mode: all dropouts are identity).

    ca = cross_attn(q=x_t, k=x_s, v=x_s);  sa = self_attn(q=k=v=ca)
    x  = LN0(sa);  x = LN1(x + fc2(relu(fc1(x))))
    """
    # TODO(synk): key_padding_mask_s / key_padding_mask_t not implemented (None path only).
    T_s, B, E = x_s.shape
    T_t = x_t.shape[0]
    H = num_heads
    D = E // H
    pc, ps, pf = params['cross'], params['self'], params['ffn']

    # --- cross attention (up to, but not including, its output projection) ---
    q2 = pallas_linear(x_t.reshape(T_t * B, E), pc['wq'], pc['bq'], out_dtype=jnp.bfloat16)
    kv = pallas_linear(x_s.reshape(T_s * B, E), pc['wkv'], pc['bkv'], out_dtype=jnp.bfloat16)
    qh = _split_heads(q2, T_t, B, H, D)
    kh = _split_heads(kv[:, :E], T_s, B, H, D)
    vh = _split_heads(kv[:, E:], T_s, B, H, D)
    o2_c = _merge_heads(pallas_attention_core(qh, kh, vh, H), T_t, B, H, D)

    # --- fused: cross out-proj + self-attn QKV projection ---
    qkv = pallas_proj2(o2_c, pc['wo'], pc['bo'], ps['wqkv'], ps['bqkv'],
                       out_dtype=jnp.bfloat16)
    qh = _split_heads(qkv[:, :E], T_t, B, H, D)
    kh = _split_heads(qkv[:, E:2 * E], T_t, B, H, D)
    vh = _split_heads(qkv[:, 2 * E:], T_t, B, H, D)
    o2_s = _merge_heads(pallas_attention_core(qh, kh, vh, H), T_t, B, H, D)

    # --- fused: self out-proj + LN0 + FFN + residual + LN1 ---
    y = pallas_out_proj_ffn(o2_s, ps['wo'], ps['bo'], pf)
    return y.reshape(T_t, B, E)


# -----------------------------------------------------------------------------
# Parameter init (deterministic, mirrors the PyTorch module, pre-transposed layout)
# -----------------------------------------------------------------------------
def xavier_uniform(key, shape):
    fan_out, fan_in = shape            # torch weight layout (out_features, in_features)
    limit = math.sqrt(6.0 / (fan_in + fan_out))
    return jax.random.uniform(key, shape, jnp.float32, -limit, limit)


def init_mha_params(key, embed_dim, num_heads):
    E = embed_dim
    D = E // num_heads
    scaling = D ** -0.5
    k1, k2 = jax.random.split(key)
    in_w = xavier_uniform(k1, (3 * E, E))      # torch in_proj_weight layout
    in_b = jnp.zeros((3 * E,), jnp.float32)
    out_w = xavier_uniform(k2, (E, E))
    out_b = jnp.zeros((E,), jnp.float32)
    # Pre-transpose to (in, out) and fold the q scaling at init time.
    wq = in_w[:E].T * scaling
    bq = in_b[:E] * scaling
    wk, wv = in_w[E:2 * E].T, in_w[2 * E:].T
    bk, bv = in_b[E:2 * E], in_b[2 * E:]
    return dict(
        wq=wq, bq=bq.reshape(1, E),
        wkv=jnp.concatenate([wk, wv], axis=1),
        bkv=jnp.concatenate([bk, bv]).reshape(1, 2 * E),
        wqkv=jnp.concatenate([wq, wk, wv], axis=1),
        bqkv=jnp.concatenate([bq, bk, bv]).reshape(1, 3 * E),
        wo=out_w.T, bo=out_b.reshape(1, E))


def init_ffn_params(key, embed_dim):
    E = embed_dim
    k1, k2 = jax.random.split(key)
    return dict(
        w1=xavier_uniform(k1, (4 * E, E)).T, b1=jnp.zeros((1, 4 * E), jnp.float32),
        w2=xavier_uniform(k2, (E, 4 * E)).T, b2=jnp.zeros((1, E), jnp.float32),
        ln0_g=jnp.ones((1, E), jnp.float32), ln0_b=jnp.zeros((1, E), jnp.float32),
        ln1_g=jnp.ones((1, E), jnp.float32), ln1_b=jnp.zeros((1, E), jnp.float32))


# NOTE: MPU also declares proj_weight_sa / proj_weight_ca / proj_bias / sigmoid, but
# they are never used in forward(), so they are intentionally not materialized here.


# -----------------------------------------------------------------------------
# Demo
# -----------------------------------------------------------------------------
if __name__ == "__main__":
    T_S, T_T, BATCH, EMBED, HEADS = 16, 8, 2, 32, 4

    key = jax.random.PRNGKey(0)
    k_xs, k_xt, k_cross, k_self, k_ffn = jax.random.split(key, 5)
    x_s = jax.random.normal(k_xs, (T_S, BATCH, EMBED), jnp.float32)
    x_t = jax.random.normal(k_xt, (T_T, BATCH, EMBED), jnp.float32)

    params = dict(cross=init_mha_params(k_cross, EMBED, HEADS),
                  self=init_mha_params(k_self, EMBED, HEADS),
                  ffn=init_ffn_params(k_ffn, EMBED))

    fwd = jax.jit(mpu_forward, static_argnames=("num_heads",))
    out = fwd(x_s, x_t, params, num_heads=HEADS)
    out = jax.block_until_ready(out)

    assert out.shape == (T_T, BATCH, EMBED)
    assert bool(jnp.all(jnp.isfinite(out)))
    print("KERNEL_OK")
</pallas_src>

<mosaic_0001>
module attributes {stable_mosaic.version = 11 : i64} {
  func.func @linear_kernel(%arg0: i32, %arg1: memref<32x32xf32, #tpu.memory_space<vmem>>, %arg2: memref<32x64xf32, #tpu.memory_space<vmem>>, %arg3: memref<1x64xf32, #tpu.memory_space<vmem>>, %arg4: memref<32x64xbf16, #tpu.memory_space<vmem>>) attributes {dimension_semantics = [#tpu.dimension_semantics<parallel>], iteration_bounds = array<i64: 1>, scalar_prefetch = 0 : i64, scratch_operands = 0 : i64, tpu.core_type = #tpu.core_type<tc>, window_params = [{transform_indices = @transform_0, window_bounds = array<i64: 32, 32>}, {pipeline_mode = #tpu.pipeline_mode<synchronous>, transform_indices = @transform_1, window_bounds = array<i64: 32, 64>}, {pipeline_mode = #tpu.pipeline_mode<synchronous>, transform_indices = @transform_2, window_bounds = array<i64: 1, 64>}, {transform_indices = @transform_3, window_bounds = array<i64: 32, 64>}]} {
    %c0 = arith.constant 0 : index
    %c0_0 = arith.constant 0 : index
    %0 = vector.load %arg1[%c0, %c0_0] : memref<32x32xf32, #tpu.memory_space<vmem>>, vector<32x32xf32>
    %1 = arith.truncf %0 : vector<32x32xf32> to vector<32x32xbf16>
    %c0_1 = arith.constant 0 : index
    %c0_2 = arith.constant 0 : index
    %2 = vector.load %arg2[%c0_1, %c0_2] : memref<32x64xf32, #tpu.memory_space<vmem>>, vector<32x64xf32>
    %3 = arith.truncf %2 : vector<32x64xf32> to vector<32x64xbf16>
    %cst = arith.constant dense<0.000000e+00> : vector<32x64xf32>
    %4 = tpu.matmul %1, %3, %cst {dimension_numbers = #tpu.dot_dimension_numbers<[1], [0], [0], [1], [0, 0, 1, 1], [], []>} : vector<32x32xbf16>, vector<32x64xbf16>, vector<32x64xf32> -> vector<32x64xf32>
    %c0_3 = arith.constant 0 : index
    %c0_4 = arith.constant 0 : index
    %5 = vector.load %arg3[%c0_3, %c0_4] : memref<1x64xf32, #tpu.memory_space<vmem>>, vector<1x64xf32>
    %6 = vector.broadcast %5 : vector<1x64xf32> to vector<32x64xf32>
    %7 = arith.addf %4, %6 : vector<32x64xf32>
    %8 = arith.truncf %7 : vector<32x64xf32> to vector<32x64xbf16>
    %c0_5 = arith.constant 0 : index
    %c0_6 = arith.constant 0 : index
    %9 = vector.load %arg4[%c0_5, %c0_6] : memref<32x64xbf16, #tpu.memory_space<vmem>>, vector<32x64xbf16>
    tpu.vector_store %arg4[%c0_5, %c0_6], %8 {strides = array<i32>} : memref<32x64xbf16, #tpu.memory_space<vmem>>, vector<32x64xbf16>,
    return
  }
  func.func @transform_0(%arg0: i32) -> (i32, i32) {
    %c0_i32 = arith.constant 0 : i32
    %c0_i32_0 = arith.constant 0 : i32
    return %arg0, %c0_i32 : i32, i32
  }
  func.func @transform_1(%arg0: i32) -> (i32, i32) {
    %c0_i32 = arith.constant 0 : i32
    %c0_i32_0 = arith.constant 0 : i32
    %c0_i32_1 = arith.constant 0 : i32
    return %c0_i32, %c0_i32_0 : i32, i32
  }
  func.func @transform_2(%arg0: i32) -> (i32, i32) {
    %c0_i32 = arith.constant 0 : i32
    %c0_i32_0 = arith.constant 0 : i32
    %c0_i32_1 = arith.constant 0 : i32
    return %c0_i32, %c0_i32_0 : i32, i32
  }
  func.func @transform_3(%arg0: i32) -> (i32, i32) {
    %c0_i32 = arith.constant 0 : i32
    %c0_i32_0 = arith.constant 0 : i32
    return %arg0, %c0_i32 : i32, i32
  }
}

module attributes {stable_mosaic.version = 11 : i64} {
  func.func @linear_kernel(%arg0: i32, %arg1: memref<16x32xf32, #tpu.memory_space<vmem>>, %arg2: memref<32x32xf32, #tpu.memory_space<vmem>>, %arg3: memref<1x32xf32, #tpu.memory_space<vmem>>, %arg4: memref<16x32xbf16, #tpu.memory_space<vmem>>) attributes {dimension_semantics = [#tpu.dimension_semantics<parallel>], iteration_bounds = array<i64: 1>, scalar_prefetch = 0 : i64, scratch_operands = 0 : i64, tpu.core_type = #tpu.core_type<tc>, window_params = [{transform_indices = @transform_0, window_bounds = array<i64: 16, 32>}, {pipeline_mode = #tpu.pipeline_mode<synchronous>, transform_indices = @transform_1, window_bounds = array<i64: 32, 32>}, {pipeline_mode = #tpu.pipeline_mode<synchronous>, transform_indices = @transform_2, window_bounds = array<i64: 1, 32>}, {transform_indices = @transform_3, window_bounds = array<i64: 16, 32>}]} {
    %c0 = arith.constant 0 : index
    %c0_0 = arith.constant 0 : index
    %0 = vector.load %arg1[%c0, %c0_0] : memref<16x32xf32, #tpu.memory_space<vmem>>, vector<16x32xf32>
    %1 = arith.truncf %0 : vector<16x32xf32> to vector<16x32xbf16>
    %c0_1 = arith.constant 0 : index
    %c0_2 = arith.constant 0 : index
    %2 = vector.load %arg2[%c0_1, %c0_2] : memref<32x32xf32, #tpu.memory_space<vmem>>, vector<32x32xf32>
    %3 = arith.truncf %2 : vector<32x32xf32> to vector<32x32xbf16>
    %cst = arith.constant dense<0.000000e+00> : vector<16x32xf32>
    %4 = tpu.matmul %1, %3, %cst {dimension_numbers = #tpu.dot_dimension_numbers<[1], [0], [0], [1], [0, 0, 1, 1], [], []>} : vector<16x32xbf16>, vector<32x32xbf16>, vector<16x32xf32> -> vector<16x32xf32>
    %c0_3 = arith.constant 0 : index
    %c0_4 = arith.constant 0 : index
    %5 = vector.load %arg3[%c0_3, %c0_4] : memref<1x32xf32, #tpu.memory_space<vmem>>, vector<1x32xf32>
    %6 = vector.broadcast %5 : vector<1x32xf32> to vector<16x32xf32>
    %7 = arith.addf %4, %6 : vector<16x32xf32>
    %8 = arith.truncf %7 : vector<16x32xf32> to vector<16x32xbf16>
    %c0_5 = arith.constant 0 : index
    %c0_6 = arith.constant 0 : index
    %9 = vector.load %arg4[%c0_5, %c0_6] : memref<16x32xbf16, #tpu.memory_space<vmem>>, vector<16x32xbf16>
    tpu.vector_store %arg4[%c0_5, %c0_6], %8 {strides = array<i32>} : memref<16x32xbf16, #tpu.memory_space<vmem>>, vector<16x32xbf16>,
    return
  }
  func.func @transform_0(%arg0: i32) -> (i32, i32) {
    %c0_i32 = arith.constant 0 : i32
    %c0_i32_0 = arith.constant 0 : i32
    return %arg0, %c0_i32 : i32, i32
  }
  func.func @transform_1(%arg0: i32) -> (i32, i32) {
    %c0_i32 = arith.constant 0 : i32
    %c0_i32_0 = arith.constant 0 : i32
    %c0_i32_1 = arith.constant 0 : i32
    return %c0_i32, %c0_i32_0 : i32, i32
  }
  func.func @transform_2(%arg0: i32) -> (i32, i32) {
    %c0_i32 = arith.constant 0 : i32
    %c0_i32_0 = arith.constant 0 : i32
    %c0_i32_1 = arith.constant 0 : i32
    return %c0_i32, %c0_i32_0 : i32, i32
  }
  func.func @transform_3(%arg0: i32) -> (i32, i32) {
    %c0_i32 = arith.constant 0 : i32
    %c0_i32_0 = arith.constant 0 : i32
    return %arg0, %c0_i32 : i32, i32
  }
}

module attributes {stable_mosaic.version = 11 : i64} {
  func.func @attn_core_kernel(%arg0: i32, %arg1: i32, %arg2: memref<4x8x8xbf16, #tpu.memory_space<vmem>>, %arg3: memref<4x16x8xbf16, #tpu.memory_space<vmem>>, %arg4: memref<4x16x8xbf16, #tpu.memory_space<vmem>>, %arg5: memref<4x8x8xbf16, #tpu.memory_space<vmem>>) attributes {dimension_semantics = [#tpu.dimension_semantics<parallel>, #tpu.dimension_semantics<parallel>], iteration_bounds = array<i64: 2, 1>, scalar_prefetch = 0 : i64, scratch_operands = 0 : i64, tpu.core_type = #tpu.core_type<tc>, window_params = [{transform_indices = @transform_0, window_bounds = array<i64: 4, 8, 8>}, {transform_indices = @transform_1, window_bounds = array<i64: 4, 16, 8>}, {transform_indices = @transform_2, window_bounds = array<i64: 4, 16, 8>}, {transform_indices = @transform_3, window_bounds = array<i64: 4, 8, 8>}]} {
    %c0 = arith.constant 0 : index
    %c0_0 = arith.constant 0 : index
    %c0_1 = arith.constant 0 : index
    %0 = vector.load %arg2[%c0, %c0_0, %c0_1] : memref<4x8x8xbf16, #tpu.memory_space<vmem>>, vector<4x8x8xbf16>
    %c0_2 = arith.constant 0 : index
    %c0_3 = arith.constant 0 : index
    %c0_4 = arith.constant 0 : index
    %1 = vector.load %arg3[%c0_2, %c0_3, %c0_4] : memref<4x16x8xbf16, #tpu.memory_space<vmem>>, vector<4x16x8xbf16>
    "tpu.trace_start"() <{level = 10 : i32, message = "hqd,hkd->hqk"}> : () -> ()
    %cst = arith.constant dense<0.000000e+00> : vector<4x8x16xf32>
    %2 = tpu.matmul %0, %1, %cst {dimension_numbers = #tpu.dot_dimension_numbers<[2], [2], [1], [1], [0, 0, 0, 1, 1, 1], [0], [0]>} : vector<4x8x8xbf16>, vector<4x16x8xbf16>, vector<4x8x16xf32> -> vector<4x8x16xf32>
    "tpu.trace_stop"() : () -> ()
    %cst_5 = arith.constant dense<0xFF800000> : vector<4x8xf32>
    %3 = vector.multi_reduction <maximumf>, %2, %cst_5 [2] : vector<4x8x16xf32> to vector<4x8xf32>
    %4 = vector.shape_cast %3 : vector<4x8xf32> to vector<4x8x1xf32>
    %5 = vector.broadcast %4 : vector<4x8x1xf32> to vector<4x8x16xf32>
    %6 = arith.subf %2, %5 : vector<4x8x16xf32>
    %7 = math.exp %6 : vector<4x8x16xf32>
    %cst_6 = arith.constant dense<0.000000e+00> : vector<4x8xf32>
    %8 = vector.multi_reduction <add>, %7, %cst_6 [2] : vector<4x8x16xf32> to vector<4x8xf32>
    %9 = vector.shape_cast %8 : vector<4x8xf32> to vector<4x8x1xf32>
    %10 = tpu.reciprocal %9 {approx = true} : vector<4x8x1xf32> -> vector<4x8x1xf32>
    %11 = vector.broadcast %10 : vector<4x8x1xf32> to vector<4x8x16xf32>
    %12 = arith.mulf %7, %11 : vector<4x8x16xf32>
    %13 = arith.truncf %12 : vector<4x8x16xf32> to vector<4x8x16xbf16>
    %c0_7 = arith.constant 0 : index
    %c0_8 = arith.constant 0 : index
    %c0_9 = arith.constant 0 : index
    %14 = vector.load %arg4[%c0_7, %c0_8, %c0_9] : memref<4x16x8xbf16, #tpu.memory_space<vmem>>, vector<4x16x8xbf16>
    "tpu.trace_start"() <{level = 10 : i32, message = "hqk,hkd->hqd"}> : () -> ()
    %cst_10 = arith.constant dense<0.000000e+00> : vector<4x8x8xf32>
    %15 = tpu.matmul %13, %14, %cst_10 {dimension_numbers = #tpu.dot_dimension_numbers<[2], [1], [1], [2], [0, 0, 0, 1, 1, 2], [0], [0]>} : vector<4x8x16xbf16>, vector<4x16x8xbf16>, vector<4x8x8xf32> -> vector<4x8x8xf32>
    "tpu.trace_stop"() : () -> ()
    %16 = arith.truncf %15 : vector<4x8x8xf32> to vector<4x8x8xbf16>
    %c0_11 = arith.constant 0 : index
    %c0_12 = arith.constant 0 : index
    %c0_13 = arith.constant 0 : index
    %17 = vector.load %arg5[%c0_11, %c0_12, %c0_13] : memref<4x8x8xbf16, #tpu.memory_space<vmem>>, vector<4x8x8xbf16>
    tpu.vector_store %arg5[%c0_11, %c0_12, %c0_13], %16 {strides = array<i32>} : memref<4x8x8xbf16, #tpu.memory_space<vmem>>, vector<4x8x8xbf16>,
    return
  }
  func.func @transform_0(%arg0: i32, %arg1: i32) -> (i32, i32, i32) {
    %c0_i32 = arith.constant 0 : i32
    %c0_i32_0 = arith.constant 0 : i32
    return %arg0, %arg1, %c0_i32 : i32, i32, i32
  }
  func.func @transform_1(%arg0: i32, %arg1: i32) -> (i32, i32, i32) {
    %c0_i32 = arith.constant 0 : i32
    %c0_i32_0 = arith.constant 0 : i32
    %c0_i32_1 = arith.constant 0 : i32
    return %arg0, %c0_i32, %c0_i32_0 : i32, i32, i32
  }
  func.func @transform_2(%arg0: i32, %arg1: i32) -> (i32, i32, i32) {
    %c0_i32 = arith.constant 0 : i32
    %c0_i32_0 = arith.constant 0 : i32
    %c0_i32_1 = arith.constant 0 : i32
    return %arg0, %c0_i32, %c0_i32_0 : i32, i32, i32
  }
  func.func @transform_3(%arg0: i32, %arg1: i32) -> (i32, i32, i32) {
    %c0_i32 = arith.constant 0 : i32
    %c0_i32_0 = arith.constant 0 : i32
    return %arg0, %arg1, %c0_i32 : i32, i32, i32
  }
}

module attributes {stable_mosaic.version = 11 : i64} {
  func.func @proj2_kernel(%arg0: i32, %arg1: memref<16x32xbf16, #tpu.memory_space<vmem>>, %arg2: memref<32x32xf32, #tpu.memory_space<vmem>>, %arg3: memref<1x32xf32, #tpu.memory_space<vmem>>, %arg4: memref<32x96xf32, #tpu.memory_space<vmem>>, %arg5: memref<1x96xf32, #tpu.memory_space<vmem>>, %arg6: memref<16x96xbf16, #tpu.memory_space<vmem>>) attributes {dimension_semantics = [#tpu.dimension_semantics<parallel>], iteration_bounds = array<i64: 1>, scalar_prefetch = 0 : i64, scratch_operands = 0 : i64, tpu.core_type = #tpu.core_type<tc>, window_params = [{transform_indices = @transform_0, window_bounds = array<i64: 16, 32>}, {pipeline_mode = #tpu.pipeline_mode<synchronous>, transform_indices = @transform_1, window_bounds = array<i64: 32, 32>}, {pipeline_mode = #tpu.pipeline_mode<synchronous>, transform_indices = @transform_2, window_bounds = array<i64: 1, 32>}, {pipeline_mode = #tpu.pipeline_mode<synchronous>, transform_indices = @transform_3, window_bounds = array<i64: 32, 96>}, {pipeline_mode = #tpu.pipeline_mode<synchronous>, transform_indices = @transform_4, window_bounds = array<i64: 1, 96>}, {transform_indices = @transform_5, window_bounds = array<i64: 16, 96>}]} {
    %c0 = arith.constant 0 : index
    %c0_0 = arith.constant 0 : index
    %0 = vector.load %arg1[%c0, %c0_0] : memref<16x32xbf16, #tpu.memory_space<vmem>>, vector<16x32xbf16>
    %c0_1 = arith.constant 0 : index
    %c0_2 = arith.constant 0 : index
    %1 = vector.load %arg2[%c0_1, %c0_2] : memref<32x32xf32, #tpu.memory_space<vmem>>, vector<32x32xf32>
    %2 = arith.truncf %1 : vector<32x32xf32> to vector<32x32xbf16>
    %cst = arith.constant dense<0.000000e+00> : vector<16x32xf32>
    %3 = tpu.matmul %0, %2, %cst {dimension_numbers = #tpu.dot_dimension_numbers<[1], [0], [0], [1], [0, 0, 1, 1], [], []>} : vector<16x32xbf16>, vector<32x32xbf16>, vector<16x32xf32> -> vector<16x32xf32>
    %c0_3 = arith.constant 0 : index
    %c0_4 = arith.constant 0 : index
    %4 = vector.load %arg3[%c0_3, %c0_4] : memref<1x32xf32, #tpu.memory_space<vmem>>, vector<1x32xf32>
    %5 = vector.broadcast %4 : vector<1x32xf32> to vector<16x32xf32>
    %6 = arith.addf %3, %5 : vector<16x32xf32>
    %7 = arith.truncf %6 : vector<16x32xf32> to vector<16x32xbf16>
    %c0_5 = arith.constant 0 : index
    %c0_6 = arith.constant 0 : index
    %8 = vector.load %arg4[%c0_5, %c0_6] : memref<32x96xf32, #tpu.memory_space<vmem>>, vector<32x96xf32>
    %9 = arith.truncf %8 : vector<32x96xf32> to vector<32x96xbf16>
    %cst_7 = arith.constant dense<0.000000e+00> : vector<16x96xf32>
    %10 = tpu.matmul %7, %9, %cst_7 {dimension_numbers = #tpu.dot_dimension_numbers<[1], [0], [0], [1], [0, 0, 1, 1], [], []>} : vector<16x32xbf16>, vector<32x96xbf16>, vector<16x96xf32> -> vector<16x96xf32>
    %c0_8 = arith.constant 0 : index
    %c0_9 = arith.constant 0 : index
    %11 = vector.load %arg5[%c0_8, %c0_9] : memref<1x96xf32, #tpu.memory_space<vmem>>, vector<1x96xf32>
    %12 = vector.broadcast %11 : vector<1x96xf32> to vector<16x96xf32>
    %13 = arith.addf %10, %12 : vector<16x96xf32>
    %14 = arith.truncf %13 : vector<16x96xf32> to vector<16x96xbf16>
    %c0_10 = arith.constant 0 : index
    %c0_11 = arith.constant 0 : index
    %15 = vector.load %arg6[%c0_10, %c0_11] : memref<16x96xbf16, #tpu.memory_space<vmem>>, vector<16x96xbf16>
    tpu.vector_store %arg6[%c0_10, %c0_11], %14 {strides = array<i32>} : memref<16x96xbf16, #tpu.memory_space<vmem>>, vector<16x96xbf16>,
    return
  }
  func.func @transform_0(%arg0: i32) -> (i32, i32) {
    %c0_i32 = arith.constant 0 : i32
    %c0_i32_0 = arith.constant 0 : i32
    return %arg0, %c0_i32 : i32, i32
  }
  func.func @transform_1(%arg0: i32) -> (i32, i32) {
    %c0_i32 = arith.constant 0 : i32
    %c0_i32_0 = arith.constant 0 : i32
    %c0_i32_1 = arith.constant 0 : i32
    return %c0_i32, %c0_i32_0 : i32, i32
  }
  func.func @transform_2(%arg0: i32) -> (i32, i32) {
    %c0_i32 = arith.constant 0 : i32
    %c0_i32_0 = arith.constant 0 : i32
    %c0_i32_1 = arith.constant 0 : i32
    return %c0_i32, %c0_i32_0 : i32, i32
  }
  func.func @transform_3(%arg0: i32) -> (i32, i32) {
    %c0_i32 = arith.constant 0 : i32
    %c0_i32_0 = arith.constant 0 : i32
    %c0_i32_1 = arith.constant 0 : i32
    return %c0_i32, %c0_i32_0 : i32, i32
  }
  func.func @transform_4(%arg0: i32) -> (i32, i32) {
    %c0_i32 = arith.constant 0 : i32
    %c0_i32_0 = arith.constant 0 : i32
    %c0_i32_1 = arith.constant 0 : i32
    return %c0_i32, %c0_i32_0 : i32, i32
  }
  func.func @transform_5(%arg0: i32) -> (i32, i32) {
    %c0_i32 = arith.constant 0 : i32
    %c0_i32_0 = arith.constant 0 : i32
    return %arg0, %c0_i32 : i32, i32
  }
}

module attributes {stable_mosaic.version = 11 : i64} {
  func.func @attn_core_kernel(%arg0: i32, %arg1: i32, %arg2: memref<4x8x8xbf16, #tpu.memory_space<vmem>>, %arg3: memref<4x8x8xbf16, #tpu.memory_space<vmem>>, %arg4: memref<4x8x8xbf16, #tpu.memory_space<vmem>>, %arg5: memref<4x8x8xbf16, #tpu.memory_space<vmem>>) attributes {dimension_semantics = [#tpu.dimension_semantics<parallel>, #tpu.dimension_semantics<parallel>], iteration_bounds = array<i64: 2, 1>, scalar_prefetch = 0 : i64, scratch_operands = 0 : i64, tpu.core_type = #tpu.core_type<tc>, window_params = [{transform_indices = @transform_0, window_bounds = array<i64: 4, 8, 8>}, {transform_indices = @transform_1, window_bounds = array<i64: 4, 8, 8>}, {transform_indices = @transform_2, window_bounds = array<i64: 4, 8, 8>}, {transform_indices = @transform_3, window_bounds = array<i64: 4, 8, 8>}]} {
    %c0 = arith.constant 0 : index
    %c0_0 = arith.constant 0 : index
    %c0_1 = arith.constant 0 : index
    %0 = vector.load %arg2[%c0, %c0_0, %c0_1] : memref<4x8x8xbf16, #tpu.memory_space<vmem>>, vector<4x8x8xbf16>
    %c0_2 = arith.constant 0 : index
    %c0_3 = arith.constant 0 : index
    %c0_4 = arith.constant 0 : index
    %1 = vector.load %arg3[%c0_2, %c0_3, %c0_4] : memref<4x8x8xbf16, #tpu.memory_space<vmem>>, vector<4x8x8xbf16>
    "tpu.trace_start"() <{level = 10 : i32, message = "hqd,hkd->hqk"}> : () -> ()
    %cst = arith.constant dense<0.000000e+00> : vector<4x8x8xf32>
    %2 = tpu.matmul %0, %1, %cst {dimension_numbers = #tpu.dot_dimension_numbers<[2], [2], [1], [1], [0, 0, 0, 1, 1, 1], [0], [0]>} : vector<4x8x8xbf16>, vector<4x8x8xbf16>, vector<4x8x8xf32> -> vector<4x8x8xf32>
    "tpu.trace_stop"() : () -> ()
    %cst_5 = arith.constant dense<0xFF800000> : vector<4x8xf32>
    %3 = vector.multi_reduction <maximumf>, %2, %cst_5 [2] : vector<4x8x8xf32> to vector<4x8xf32>
    %4 = vector.shape_cast %3 : vector<4x8xf32> to vector<4x8x1xf32>
    %5 = vector.broadcast %4 : vector<4x8x1xf32> to vector<4x8x8xf32>
    %6 = arith.subf %2, %5 : vector<4x8x8xf32>
    %7 = math.exp %6 : vector<4x8x8xf32>
    %cst_6 = arith.constant dense<0.000000e+00> : vector<4x8xf32>
    %8 = vector.multi_reduction <add>, %7, %cst_6 [2] : vector<4x8x8xf32> to vector<4x8xf32>
    %9 = vector.shape_cast %8 : vector<4x8xf32> to vector<4x8x1xf32>
    %10 = tpu.reciprocal %9 {approx = true} : vector<4x8x1xf32> -> vector<4x8x1xf32>
    %11 = vector.broadcast %10 : vector<4x8x1xf32> to vector<4x8x8xf32>
    %12 = arith.mulf %7, %11 : vector<4x8x8xf32>
    %13 = arith.truncf %12 : vector<4x8x8xf32> to vector<4x8x8xbf16>
    %c0_7 = arith.constant 0 : index
    %c0_8 = arith.constant 0 : index
    %c0_9 = arith.constant 0 : index
    %14 = vector.load %arg4[%c0_7, %c0_8, %c0_9] : memref<4x8x8xbf16, #tpu.memory_space<vmem>>, vector<4x8x8xbf16>
    "tpu.trace_start"() <{level = 10 : i32, message = "hqk,hkd->hqd"}> : () -> ()
    %cst_10 = arith.constant dense<0.000000e+00> : vector<4x8x8xf32>
    %15 = tpu.matmul %13, %14, %cst_10 {dimension_numbers = #tpu.dot_dimension_numbers<[2], [1], [1], [2], [0, 0, 0, 1, 1, 2], [0], [0]>} : vector<4x8x8xbf16>, vector<4x8x8xbf16>, vector<4x8x8xf32> -> vector<4x8x8xf32>
    "tpu.trace_stop"() : () -> ()
    %16 = arith.truncf %15 : vector<4x8x8xf32> to vector<4x8x8xbf16>
    %c0_11 = arith.constant 0 : index
    %c0_12 = arith.constant 0 : index
    %c0_13 = arith.constant 0 : index
    %17 = vector.load %arg5[%c0_11, %c0_12, %c0_13] : memref<4x8x8xbf16, #tpu.memory_space<vmem>>, vector<4x8x8xbf16>
    tpu.vector_store %arg5[%c0_11, %c0_12, %c0_13], %16 {strides = array<i32>} : memref<4x8x8xbf16, #tpu.memory_space<vmem>>, vector<4x8x8xbf16>,
    return
  }
  func.func @transform_0(%arg0: i32, %arg1: i32) -> (i32, i32, i32) {
    %c0_i32 = arith.constant 0 : i32
    %c0_i32_0 = arith.constant 0 : i32
    return %arg0, %arg1, %c0_i32 : i32, i32, i32
  }
  func.func @transform_1(%arg0: i32, %arg1: i32) -> (i32, i32, i32) {
    %c0_i32 = arith.constant 0 : i32
    %c0_i32_0 = arith.constant 0 : i32
    %c0_i32_1 = arith.constant 0 : i32
    return %arg0, %c0_i32, %c0_i32_0 : i32, i32, i32
  }
  func.func @transform_2(%arg0: i32, %arg1: i32) -> (i32, i32, i32) {
    %c0_i32 = arith.constant 0 : i32
    %c0_i32_0 = arith.constant 0 : i32
    %c0_i32_1 = arith.constant 0 : i32
    return %arg0, %c0_i32, %c0_i32_0 : i32, i32, i32
  }
  func.func @transform_3(%arg0: i32, %arg1: i32) -> (i32, i32, i32) {
    %c0_i32 = arith.constant 0 : i32
    %c0_i32_0 = arith.constant 0 : i32
    return %arg0, %arg1, %c0_i32 : i32, i32, i32
  }
}

module attributes {stable_mosaic.version = 11 : i64} {
  func.func @out_proj_ffn_kernel(%arg0: i32, %arg1: memref<16x32xbf16, #tpu.memory_space<vmem>>, %arg2: memref<32x32xf32, #tpu.memory_space<vmem>>, %arg3: memref<1x32xf32, #tpu.memory_space<vmem>>, %arg4: memref<32x128xf32, #tpu.memory_space<vmem>>, %arg5: memref<1x128xf32, #tpu.memory_space<vmem>>, %arg6: memref<128x32xf32, #tpu.memory_space<vmem>>, %arg7: memref<1x32xf32, #tpu.memory_space<vmem>>, %arg8: memref<1x32xf32, #tpu.memory_space<vmem>>, %arg9: memref<1x32xf32, #tpu.memory_space<vmem>>, %arg10: memref<1x32xf32, #tpu.memory_space<vmem>>, %arg11: memref<1x32xf32, #tpu.memory_space<vmem>>, %arg12: memref<16x32xf32, #tpu.memory_space<vmem>>) attributes {dimension_semantics = [#tpu.dimension_semantics<parallel>], iteration_bounds = array<i64: 1>, scalar_prefetch = 0 : i64, scratch_operands = 0 : i64, tpu.core_type = #tpu.core_type<tc>, window_params = [{transform_indices = @transform_0, window_bounds = array<i64: 16, 32>}, {pipeline_mode = #tpu.pipeline_mode<synchronous>, transform_indices = @transform_1, window_bounds = array<i64: 32, 32>}, {pipeline_mode = #tpu.pipeline_mode<synchronous>, transform_indices = @transform_2, window_bounds = array<i64: 1, 32>}, {pipeline_mode = #tpu.pipeline_mode<synchronous>, transform_indices = @transform_3, window_bounds = array<i64: 32, 128>}, {pipeline_mode = #tpu.pipeline_mode<synchronous>, transform_indices = @transform_4, window_bounds = array<i64: 1, 128>}, {pipeline_mode = #tpu.pipeline_mode<synchronous>, transform_indices = @transform_5, window_bounds = array<i64: 128, 32>}, {pipeline_mode = #tpu.pipeline_mode<synchronous>, transform_indices = @transform_6, window_bounds = array<i64: 1, 32>}, {pipeline_mode = #tpu.pipeline_mode<synchronous>, transform_indices = @transform_7, window_bounds = array<i64: 1, 32>}, {pipeline_mode = #tpu.pipeline_mode<synchronous>, transform_indices = @transform_8, window_bounds = array<i64: 1, 32>}, {pipeline_mode = #tpu.pipeline_mode<synchronous>, transform_indices = @transform_9, window_bounds = array<i64: 1, 32>}, {pipeline_mode = #tpu.pipeline_mode<synchronous>, transform_indices = @transform_10, window_bounds = array<i64: 1, 32>}, {transform_indices = @transform_11, window_bounds = array<i64: 16, 32>}]} {
    %c0 = arith.constant 0 : index
    %c0_0 = arith.constant 0 : index
    %0 = vector.load %arg1[%c0, %c0_0] : memref<16x32xbf16, #tpu.memory_space<vmem>>, vector<16x32xbf16>
    %c0_1 = arith.constant 0 : index
    %c0_2 = arith.constant 0 : index
    %1 = vector.load %arg2[%c0_1, %c0_2] : memref<32x32xf32, #tpu.memory_space<vmem>>, vector<32x32xf32>
    %2 = arith.truncf %1 : vector<32x32xf32> to vector<32x32xbf16>
    %cst = arith.constant dense<0.000000e+00> : vector<16x32xf32>
    %3 = tpu.matmul %0, %2, %cst {dimension_numbers = #tpu.dot_dimension_numbers<[1], [0], [0], [1], [0, 0, 1, 1], [], []>} : vector<16x32xbf16>, vector<32x32xbf16>, vector<16x32xf32> -> vector<16x32xf32>
    %c0_3 = arith.constant 0 : index
    %c0_4 = arith.constant 0 : index
    %4 = vector.load %arg3[%c0_3, %c0_4] : memref<1x32xf32, #tpu.memory_space<vmem>>, vector<1x32xf32>
    %5 = vector.broadcast %4 : vector<1x32xf32> to vector<16x32xf32>
    %6 = arith.addf %3, %5 : vector<16x32xf32>
    %c0_5 = arith.constant 0 : index
    %c0_6 = arith.constant 0 : index
    %7 = vector.load %arg8[%c0_5, %c0_6] : memref<1x32xf32, #tpu.memory_space<vmem>>, vector<1x32xf32>
    %c0_7 = arith.constant 0 : index
    %c0_8 = arith.constant 0 : index
    %8 = vector.load %arg9[%c0_7, %c0_8] : memref<1x32xf32, #tpu.memory_space<vmem>>, vector<1x32xf32>
    %cst_9 = arith.constant dense<0.000000e+00> : vector<16xf32>
    %9 = vector.multi_reduction <add>, %6, %cst_9 [1] : vector<16x32xf32> to vector<16xf32>
    %10 = vector.shape_cast %9 : vector<16xf32> to vector<16x1xf32>
    %cst_10 = arith.constant 3.200000e+01 : f32
    %11 = vector.broadcast %cst_10 : f32 to vector<16x1xf32>
    %12 = arith.divf %10, %11 : vector<16x1xf32>
    %13 = vector.broadcast %12 : vector<16x1xf32> to vector<16x32xf32>
    %14 = arith.subf %6, %13 : vector<16x32xf32>
    %15 = arith.mulf %14, %14 : vector<16x32xf32>
    %cst_11 = arith.constant dense<0.000000e+00> : vector<16xf32>
    %16 = vector.multi_reduction <add>, %15, %cst_11 [1] : vector<16x32xf32> to vector<16xf32>
    %17 = vector.shape_cast %16 : vector<16xf32> to vector<16x1xf32>
    %cst_12 = arith.constant 3.200000e+01 : f32
    %18 = vector.broadcast %cst_12 : f32 to vector<16x1xf32>
    %19 = arith.divf %17, %18 : vector<16x1xf32>
    %20 = vector.broadcast %12 : vector<16x1xf32> to vector<16x32xf32>
    %21 = arith.subf %6, %20 : vector<16x32xf32>
    %cst_13 = arith.constant 9.99999974E-6 : f32
    %22 = vector.broadcast %cst_13 : f32 to vector<16x1xf32>
    %23 = arith.addf %19, %22 : vector<16x1xf32>
    %24 = math.rsqrt %23 : vector<16x1xf32>
    %25 = vector.broadcast %24 : vector<16x1xf32> to vector<16x32xf32>
    %26 = arith.mulf %21, %25 : vector<16x32xf32>
    %27 = vector.broadcast %7 : vector<1x32xf32> to vector<16x32xf32>
    %28 = arith.mulf %26, %27 : vector<16x32xf32>
    %29 = vector.broadcast %8 : vector<1x32xf32> to vector<16x32xf32>
    %30 = arith.addf %28, %29 : vector<16x32xf32>
    %31 = arith.truncf %30 : vector<16x32xf32> to vector<16x32xbf16>
    %c0_14 = arith.constant 0 : index
    %c0_15 = arith.constant 0 : index
    %32 = vector.load %arg4[%c0_14, %c0_15] : memref<32x128xf32, #tpu.memory_space<vmem>>, vector<32x128xf32>
    %33 = arith.truncf %32 : vector<32x128xf32> to vector<32x128xbf16>
    %cst_16 = arith.constant dense<0.000000e+00> : vector<16x128xf32>
    %34 = tpu.matmul %31, %33, %cst_16 {dimension_numbers = #tpu.dot_dimension_numbers<[1], [0], [0], [1], [0, 0, 1, 1], [], []>} : vector<16x32xbf16>, vector<32x128xbf16>, vector<16x128xf32> -> vector<16x128xf32>
    %c0_17 = arith.constant 0 : index
    %c0_18 = arith.constant 0 : index
    %35 = vector.load %arg5[%c0_17, %c0_18] : memref<1x128xf32, #tpu.memory_space<vmem>>, vector<1x128xf32>
    %36 = vector.broadcast %35 : vector<1x128xf32> to vector<16x128xf32>
    %37 = arith.addf %34, %36 : vector<16x128xf32>
    %cst_19 = arith.constant 0.000000e+00 : f32
    %38 = vector.broadcast %cst_19 : f32 to vector<16x128xf32>
    %39 = arith.maximumf %37, %38 : vector<16x128xf32>
    %40 = arith.truncf %39 : vector<16x128xf32> to vector<16x128xbf16>
    %c0_20 = arith.constant 0 : index
    %c0_21 = arith.constant 0 : index
    %41 = vector.load %arg6[%c0_20, %c0_21] : memref<128x32xf32, #tpu.memory_space<vmem>>, vector<128x32xf32>
    %42 = arith.truncf %41 : vector<128x32xf32> to vector<128x32xbf16>
    %cst_22 = arith.constant dense<0.000000e+00> : vector<16x32xf32>
    %43 = tpu.matmul %40, %42, %cst_22 {dimension_numbers = #tpu.dot_dimension_numbers<[1], [0], [0], [1], [0, 0, 1, 1], [], []>} : vector<16x128xbf16>, vector<128x32xbf16>, vector<16x32xf32> -> vector<16x32xf32>
    %c0_23 = arith.constant 0 : index
    %c0_24 = arith.constant 0 : index
    %44 = vector.load %arg7[%c0_23, %c0_24] : memref<1x32xf32, #tpu.memory_space<vmem>>, vector<1x32xf32>
    %45 = vector.broadcast %44 : vector<1x32xf32> to vector<16x32xf32>
    %46 = arith.addf %43, %45 : vector<16x32xf32>
    %47 = arith.addf %30, %46 : vector<16x32xf32>
    %c0_25 = arith.constant 0 : index
    %c0_26 = arith.constant 0 : index
    %48 = vector.load %arg10[%c0_25, %c0_26] : memref<1x32xf32, #tpu.memory_space<vmem>>, vector<1x32xf32>
    %c0_27 = arith.constant 0 : index
    %c0_28 = arith.constant 0 : index
    %49 = vector.load %arg11[%c0_27, %c0_28] : memref<1x32xf32, #tpu.memory_space<vmem>>, vector<1x32xf32>
    %cst_29 = arith.constant dense<0.000000e+00> : vector<16xf32>
    %50 = vector.multi_reduction <add>, %47, %cst_29 [1] : vector<16x32xf32> to vector<16xf32>
    %51 = vector.shape_cast %50 : vector<16xf32> to vector<16x1xf32>
    %cst_30 = arith.constant 3.200000e+01 : f32
    %52 = vector.broadcast %cst_30 : f32 to vector<16x1xf32>
    %53 = arith.divf %51, %52 : vector<16x1xf32>
    %54 = vector.broadcast %53 : vector<16x1xf32> to vector<16x32xf32>
    %55 = arith.subf %47, %54 : vector<16x32xf32>
    %56 = arith.mulf %55, %55 : vector<16x32xf32>
    %cst_31 = arith.constant dense<0.000000e+00> : vector<16xf32>
    %57 = vector.multi_reduction <add>, %56, %cst_31 [1] : vector<16x32xf32> to vector<16xf32>
    %58 = vector.shape_cast %57 : vector<16xf32> to vector<16x1xf32>
    %cst_32 = arith.constant 3.200000e+01 : f32
    %59 = vector.broadcast %cst_32 : f32 to vector<16x1xf32>
    %60 = arith.divf %58, %59 : vector<16x1xf32>
    %61 = vector.broadcast %53 : vector<16x1xf32> to vector<16x32xf32>
    %62 = arith.subf %47, %61 : vector<16x32xf32>
    %cst_33 = arith.constant 9.99999974E-6 : f32
    %63 = vector.broadcast %cst_33 : f32 to vector<16x1xf32>
    %64 = arith.addf %60, %63 : vector<16x1xf32>
    %65 = math.rsqrt %64 : vector<16x1xf32>
    %66 = vector.broadcast %65 : vector<16x1xf32> to vector<16x32xf32>
    %67 = arith.mulf %62, %66 : vector<16x32xf32>
    %68 = vector.broadcast %48 : vector<1x32xf32> to vector<16x32xf32>
    %69 = arith.mulf %67, %68 : vector<16x32xf32>
    %70 = vector.broadcast %49 : vector<1x32xf32> to vector<16x32xf32>
    %71 = arith.addf %69, %70 : vector<16x32xf32>
    %c0_34 = arith.constant 0 : index
    %c0_35 = arith.constant 0 : index
    %72 = vector.load %arg12[%c0_34, %c0_35] : memref<16x32xf32, #tpu.memory_space<vmem>>, vector<16x32xf32>
    tpu.vector_store %arg12[%c0_34, %c0_35], %71 {strides = array<i32>} : memref<16x32xf32, #tpu.memory_space<vmem>>, vector<16x32xf32>,
    return
  }
  func.func @transform_0(%arg0: i32) -> (i32, i32) {
    %c0_i32 = arith.constant 0 : i32
    %c0_i32_0 = arith.constant 0 : i32
    return %arg0, %c0_i32 : i32, i32
  }
  func.func @transform_1(%arg0: i32) -> (i32, i32) {
    %c0_i32 = arith.constant 0 : i32
    %c0_i32_0 = arith.constant 0 : i32
    %c0_i32_1 = arith.constant 0 : i32
    return %c0_i32, %c0_i32_0 : i32, i32
  }
  func.func @transform_2(%arg0: i32) -> (i32, i32) {
    %c0_i32 = arith.constant 0 : i32
    %c0_i32_0 = arith.constant 0 : i32
    %c0_i32_1 = arith.constant 0 : i32
    return %c0_i32, %c0_i32_0 : i32, i32
  }
  func.func @transform_3(%arg0: i32) -> (i32, i32) {
    %c0_i32 = arith.constant 0 : i32
    %c0_i32_0 = arith.constant 0 : i32
    %c0_i32_1 = arith.constant 0 : i32
    return %c0_i32, %c0_i32_0 : i32, i32
  }
  func.func @transform_4(%arg0: i32) -> (i32, i32) {
    %c0_i32 = arith.constant 0 : i32
    %c0_i32_0 = arith.constant 0 : i32
    %c0_i32_1 = arith.constant 0 : i32
    return %c0_i32, %c0_i32_0 : i32, i32
  }
  func.func @transform_5(%arg0: i32) -> (i32, i32) {
    %c0_i32 = arith.constant 0 : i32
    %c0_i32_0 = arith.constant 0 : i32
    %c0_i32_1 = arith.constant 0 : i32
    return %c0_i32, %c0_i32_0 : i32, i32
  }
  func.func @transform_6(%arg0: i32) -> (i32, i32) {
    %c0_i32 = arith.constant 0 : i32
    %c0_i32_0 = arith.constant 0 : i32
    %c0_i32_1 = arith.constant 0 : i32
    return %c0_i32, %c0_i32_0 : i32, i32
  }
  func.func @transform_7(%arg0: i32) -> (i32, i32) {
    %c0_i32 = arith.constant 0 : i32
    %c0_i32_0 = arith.constant 0 : i32
    %c0_i32_1 = arith.constant 0 : i32
    return %c0_i32, %c0_i32_0 : i32, i32
  }
  func.func @transform_8(%arg0: i32) -> (i32, i32) {
    %c0_i32 = arith.constant 0 : i32
    %c0_i32_0 = arith.constant 0 : i32
    %c0_i32_1 = arith.constant 0 : i32
    return %c0_i32, %c0_i32_0 : i32, i32
  }
  func.func @transform_9(%arg0: i32) -> (i32, i32) {
    %c0_i32 = arith.constant 0 : i32
    %c0_i32_0 = arith.constant 0 : i32
    %c0_i32_1 = arith.constant 0 : i32
    return %c0_i32, %c0_i32_0 : i32, i32
  }
  func.func @transform_10(%arg0: i32) -> (i32, i32) {
    %c0_i32 = arith.constant 0 : i32
    %c0_i32_0 = arith.constant 0 : i32
    %c0_i32_1 = arith.constant 0 : i32
    return %c0_i32, %c0_i32_0 : i32, i32
  }
  func.func @transform_11(%arg0: i32) -> (i32, i32) {
    %c0_i32 = arith.constant 0 : i32
    %c0_i32_0 = arith.constant 0 : i32
    return %arg0, %c0_i32 : i32, i32
  }
}

</mosaic_0001>

<llo_original>
// kernel: mpu_forward.7
$region0: #{mpu_forward.7}
  #allocation0 [shape = 'u32[]', space=smem, size = 0x4, offset = 0x4, fixed_abs, tag = 'smem constant byte address 0x4 - core index']
  #allocation1 [shape = 'u32[144,128]{1,0:T(1,128)}', space=vmem, size = 0x12000, scoped, tag = 'internal scratch']
  %s0 = inlined_call_operand.vmem [shape: f32[32,32], index: 0, kind: input, shape index: {}]
  %s1 = inlined_call_operand.vmem [shape: f32[32,64], index: 1, kind: input, shape index: {}]
  %s2 = inlined_call_operand.vmem [shape: f32[1,64], index: 2, kind: input, shape index: {}]
  %s3 = inlined_call_operand.vmem [shape: bf16[32,64], index: 3, kind: output, shape index: {}]
  %s4 = sld [smem:[#allocation0]]
  $region22: #{mpu_forward.7} parent=0
    _
  %s6 = ssub.s32 1, %s4
  %s7 = scalar_select 0, %s6, %s4
  // Predicated region
  $region2: #{mpu_forward.7} parent=0 // pred_check
    _
  $region3: #{mpu_forward.7} parent=0 // pred_check_branch
    %9 = sbr.rel (0) target = $region5
  $region4: #{mpu_forward.7} parent=0 // pred_region
    _
  $region5: #{mpu_forward.7} parent=0 // pred_fallthru
    _
  // Predicated region
  $region6: #{mpu_forward.7} parent=0 // pred_check
    _
  $region7: #{mpu_forward.7} parent=0 // pred_check_branch
    %11 = sbr.rel (0) target = $region9
  $region8: #{mpu_forward.7} parent=0 // pred_region
    _
  $region9: #{mpu_forward.7} parent=0 // pred_fallthru
    _
  // Predicated region
  $region10: #{mpu_forward.7} parent=0 // pred_check
    _
  $region11: #{mpu_forward.7} parent=0 // pred_check_branch
    %13 = sbr.rel (0) target = $region13
  $region12: #{mpu_forward.7} parent=0 // pred_region
    _
  $region13: #{mpu_forward.7} parent=0 // pred_fallthru
    _
  %v15 = vld [vmem:[%s0] sm:$0xff]
  %v16 = vld [vmem:[%s0 + $0x8] sm:$0xff]
  %v17 = vld [vmem:[%s0 + $0x10] sm:$0xff]
  %v18 = vld [vmem:[%s0 + $0x18] sm:$0xff]
  %v19 = vpack.c.bf16 %v16, %v15
  %v20 = vpack.c.bf16 %v18, %v17
  %v21 = vld [vmem:[%s1] sm:$0xff]
  %v22 = vld [vmem:[%s1 + $0x8] sm:$0xff]
  %v23 = vld [vmem:[%s1 + $0x10] sm:$0xff]
  %v24 = vld [vmem:[%s1 + $0x18] sm:$0xff]
  %v25 = vpack.c.bf16 %v22, %v21
  %v26 = vpack.c.bf16 %v24, %v23
  %v27 = vld [vmem:[%s2] sm:$0x1]
  %v29 = vlaneseq
  %v30 = vshrl.u32 %v29, 7
  %v31 = vsub.s32 0, %v30
  %v32 = vrot.slane %v27, %v31
  %vm34 = vcmask 261120
  %v36 = vsel %vm34, %v19, 0
  %v39 = vsel %vm34, %v20, 0
  %41 = vmatprep.subr.bf16.mxu0 0
  %42 = vmatpush1.bf16.msra.mxu0 %v25
  %43 = vmatprep.subr.bf16.mxu0 0
  %44 = vmatpush1.bf16.msra.mxu0 %v26
  %45 = vmatprep.subr.bf16.mxu0 0
  %46 = vmatpush1.bf16.msra.mxu0 0
  %47 = vmatprep.subr.bf16.mxu0 0
  %48 = vmatpush1.bf16.msra.mxu0 0
  %49 = vmatprep.subr.bf16.mxu0 0
  %50 = vmatpush1.bf16.msra.mxu0 0
  %51 = vmatprep.subr.bf16.mxu0 0
  %52 = vmatpush1.bf16.msra.mxu0 0
  %53 = vmatprep.subr.bf16.mxu0 0
  %54 = vmatpush1.bf16.msra.mxu0 0
  %55 = vmatprep.subr.bf16.mxu0 0
  %56 = vmatpush1.bf16.msra.mxu0 0
  %57 = vmatprep.subr.bf16.mxu0 0
  %58 = vmatpush1.bf16.msra.mxu0 0
  %59 = vmatprep.subr.bf16.mxu0 0
  %60 = vmatpush1.bf16.msra.mxu0 0
  %61 = vmatprep.subr.bf16.mxu0 0
  %62 = vmatpush1.bf16.msra.mxu0 0
  %63 = vmatprep.subr.bf16.mxu0 0
  %64 = vmatpush1.bf16.msra.mxu0 0
  %65 = vmatprep.subr.bf16.mxu0 0
  %66 = vmatpush1.bf16.msra.mxu0 0
  %67 = vmatprep.subr.bf16.mxu0 0
  %68 = vmatpush1.bf16.msra.mxu0 0
  %69 = vmatprep.subr.bf16.mxu0 0
  %70 = vmatpush1.bf16.msra.mxu0 0
  %71 = vmatprep.subr.bf16.mxu0 0
  %72 = vmatpush1.bf16.msra.mxu0 0
  %73 = vmatprep.mubr.bf16.mxu0 0
  %74 = vmatmul.mubr.bf16.gmra.mrb[0].mxu0 %v36
  %v75 = vpop.f32.mrb[0].mxu0
  %v76 = vadd.f32 %v32, %v75
  %v77 = vpop.f32.mrb[0].mxu0
  %v78 = vpop.f32.mrb[0].mxu0
  %v79 = vadd.f32 %v32, %v78
  %v80 = vpop.f32.mrb[0].mxu0
  %81 = vmatprep.mubr.bf16.mxu0 0
  %82 = vmatmul.mubr.bf16.gmra.mrb[0].mxu0 %v39
  %v83 = vpop.f32.mrb[0].mxu0
  %v84 = vadd.f32 %v32, %v83
  %v85 = vpop.f32.mrb[0].mxu0
  %v86 = vpop.f32.mrb[0].mxu0
  %v87 = vadd.f32 %v32, %v86
  %v88 = vpop.f32.mrb[0].mxu0
  %89 = vdwg.mxu0
  %v90 = vpack.c.bf16 %v79, %v76
  %v91 = vpack.c.bf16 %v87, %v84
  %v94 = vunpack.c.l.b16 %v90
  %v95 = vunpack.c.h.b16 %v90
  %v96 = vunpack.c.l.b16 %v91
  %v97 = vunpack.c.h.b16 %v91
  %v98 = vpack.c.b16 %v94, %v94
  %v99 = vpack.c.b16 %v95, %v95
  %v100 = vpack.c.b16 %v96, %v96
  %v101 = vpack.c.b16 %v97, %v97
  %vm106 = vcmask 519168
  %107 = vst.msk [vmem:[%s3] sm:$0xf] %vm106, %v98
  %108 = vst.msk [vmem:[%s3 + $0x4] sm:$0xf] %vm106, %v99
  %109 = vst.msk [vmem:[%s3 + $0x8] sm:$0xf] %vm106, %v100
  %110 = vst.msk [vmem:[%s3 + $0xc] sm:$0xf] %vm106, %v101
  // Predicated region
  $region14: #{mpu_forward.7} parent=0 // pred_check
    _
  $region15: #{mpu_forward.7} parent=0 // pred_check_branch
    %112 = sbr.rel (0) target = $region17
  $region16: #{mpu_forward.7} parent=0 // pred_region
    _
  $region17: #{mpu_forward.7} parent=0 // pred_fallthru
    _
  // Predicated region
  $region18: #{mpu_forward.7} parent=0 // pred_check
    _
  $region19: #{mpu_forward.7} parent=0 // pred_check_branch
    %114 = sbr.rel (0) target = $region21
  $region20: #{mpu_forward.7} parent=0 // pred_region
    _
  $region21: #{mpu_forward.7} parent=0 // pred_fallthru
    _

// kernel: mpu_forward.6
$region0: #{mpu_forward.6}
  #allocation0 [shape = 'u32[]', space=smem, size = 0x4, offset = 0x4, fixed_abs, tag = 'smem constant byte address 0x4 - core index']
  #allocation1 [shape = 'u32[144,128]{1,0:T(1,128)}', space=vmem, size = 0x12000, scoped, tag = 'internal scratch']
  %s0 = inlined_call_operand.vmem [shape: f32[16,32], index: 0, kind: input, shape index: {}]
  %s1 = inlined_call_operand.vmem [shape: f32[32,32], index: 1, kind: input, shape index: {}]
  %s2 = inlined_call_operand.vmem [shape: f32[1,32], index: 2, kind: input, shape index: {}]
  %s3 = inlined_call_operand.vmem [shape: bf16[16,32], index: 3, kind: output, shape index: {}]
  %s4 = sld [smem:[#allocation0]]
  $region22: #{mpu_forward.6} parent=0
    _
  %s6 = ssub.s32 1, %s4
  %s7 = scalar_select 0, %s6, %s4
  // Predicated region
  $region2: #{mpu_forward.6} parent=0 // pred_check
    _
  $region3: #{mpu_forward.6} parent=0 // pred_check_branch
    %9 = sbr.rel (0) target = $region5
  $region4: #{mpu_forward.6} parent=0 // pred_region
    _
  $region5: #{mpu_forward.6} parent=0 // pred_fallthru
    _
  // Predicated region
  $region6: #{mpu_forward.6} parent=0 // pred_check
    _
  $region7: #{mpu_forward.6} parent=0 // pred_check_branch
    %11 = sbr.rel (0) target = $region9
  $region8: #{mpu_forward.6} parent=0 // pred_region
    _
  $region9: #{mpu_forward.6} parent=0 // pred_fallthru
    _
  // Predicated region
  $region10: #{mpu_forward.6} parent=0 // pred_check
    _
  $region11: #{mpu_forward.6} parent=0 // pred_check_branch
    %13 = sbr.rel (0) target = $region13
  $region12: #{mpu_forward.6} parent=0 // pred_region
    _
  $region13: #{mpu_forward.6} parent=0 // pred_fallthru
    _
  %v15 = vld [vmem:[%s0] sm:$0xff]
  %v16 = vld [vmem:[%s0 + $0x8] sm:$0xff]
  %v17 = vpack.c.bf16 %v16, %v15
  %v18 = vld [vmem:[%s1] sm:$0xff]
  %v19 = vld [vmem:[%s1 + $0x8] sm:$0xff]
  %v20 = vld [vmem:[%s1 + $0x10] sm:$0xff]
  %v21 = vld [vmem:[%s1 + $0x18] sm:$0xff]
  %v22 = vpack.c.bf16 %v19, %v18
  %v23 = vpack.c.bf16 %v21, %v20
  %v24 = vld [vmem:[%s2] sm:$0x1]
  %v26 = vlaneseq
  %v27 = vshrl.u32 %v26, 7
  %v28 = vsub.s32 0, %v27
  %v29 = vrot.slane %v24, %v28
  %vm31 = vcmask 261120
  %v33 = vsel %vm31, %v17, 0
  %35 = vmatprep.subr.bf16.mxu0 0
  %36 = vmatpush1.bf16.msra.mxu0 %v22
  %37 = vmatprep.subr.bf16.mxu0 0
  %38 = vmatpush1.bf16.msra.mxu0 %v23
  %39 = vmatprep.subr.bf16.mxu0 0
  %40 = vmatpush1.bf16.msra.mxu0 0
  %41 = vmatprep.subr.bf16.mxu0 0
  %42 = vmatpush1.bf16.msra.mxu0 0
  %43 = vmatprep.subr.bf16.mxu0 0
  %44 = vmatpush1.bf16.msra.mxu0 0
  %45 = vmatprep.subr.bf16.mxu0 0
  %46 = vmatpush1.bf16.msra.mxu0 0
  %47 = vmatprep.subr.bf16.mxu0 0
  %48 = vmatpush1.bf16.msra.mxu0 0
  %49 = vmatprep.subr.bf16.mxu0 0
  %50 = vmatpush1.bf16.msra.mxu0 0
  %51 = vmatprep.subr.bf16.mxu0 0
  %52 = vmatpush1.bf16.msra.mxu0 0
  %53 = vmatprep.subr.bf16.mxu0 0
  %54 = vmatpush1.bf16.msra.mxu0 0
  %55 = vmatprep.subr.bf16.mxu0 0
  %56 = vmatpush1.bf16.msra.mxu0 0
  %57 = vmatprep.subr.bf16.mxu0 0
  %58 = vmatpush1.bf16.msra.mxu0 0
  %59 = vmatprep.subr.bf16.mxu0 0
  %60 = vmatpush1.bf16.msra.mxu0 0
  %61 = vmatprep.subr.bf16.mxu0 0
  %62 = vmatpush1.bf16.msra.mxu0 0
  %63 = vmatprep.subr.bf16.mxu0 0
  %64 = vmatpush1.bf16.msra.mxu0 0
  %65 = vmatprep.subr.bf16.mxu0 0
  %66 = vmatpush1.bf16.msra.mxu0 0
  %67 = vmatprep.mubr.bf16.mxu0 0
  %68 = vmatmul.mubr.bf16.gmra.mrb[0].mxu0 %v33
  %v69 = vpop.f32.mrb[0].mxu0
  %v70 = vadd.f32 %v29, %v69
  %v71 = vpop.f32.mrb[0].mxu0
  %v72 = vpop.f32.mrb[0].mxu0
  %v73 = vadd.f32 %v29, %v72
  %v74 = vpop.f32.mrb[0].mxu0
  %75 = vdwg.mxu0
  %v76 = vpack.c.bf16 %v73, %v70
  %v78 = vunpack.c.l.b16 %v76
  %v79 = vunpack.c.h.b16 %v76
  %v80 = vpack.c.b16 %v78, %v78
  %v81 = vpack.c.b16 %v79, %v79
  %vm84 = vcmask 257024
  %85 = vst.msk [vmem:[%s3] sm:$0xf] %vm84, %v80
  %86 = vst.msk [vmem:[%s3 + $0x4] sm:$0xf] %vm84, %v81
  // Predicated region
  $region14: #{mpu_forward.6} parent=0 // pred_check
    _
  $region15: #{mpu_forward.6} parent=0 // pred_check_branch
    %88 = sbr.rel (0) target = $region17
  $region16: #{mpu_forward.6} parent=0 // pred_region
    _
  $region17: #{mpu_forward.6} parent=0 // pred_fallthru
    _
  // Predicated region
  $region18: #{mpu_forward.6} parent=0 // pred_check
    _
  $region19: #{mpu_forward.6} parent=0 // pred_check_branch
    %90 = sbr.rel (0) target = $region21
  $region20: #{mpu_forward.6} parent=0 // pred_region
    _
  $region21: #{mpu_forward.6} parent=0 // pred_fallthru
    _

// kernel: mpu_forward.9
$region0: #{mpu_forward.9}
  #allocation0 [shape = 'u32[]', space=smem, size = 0x4, offset = 0x4, fixed_abs, tag = 'smem constant byte address 0x4 - core index']
  #allocation1 [shape = 'u32[144,128]{1,0:T(1,128)}', space=vmem, size = 0x12000, scoped, tag = 'internal scratch']
  %s0 = inlined_call_operand.vmem [shape: bf16[16,32], index: 0, kind: input, shape index: {}]
  %s1 = inlined_call_operand.vmem [shape: f32[32,32], index: 1, kind: input, shape index: {}]
  %s2 = inlined_call_operand.vmem [shape: f32[1,32], index: 2, kind: input, shape index: {}]
  %s3 = inlined_call_operand.vmem [shape: f32[32,96], index: 3, kind: input, shape index: {}]
  %s4 = inlined_call_operand.vmem [shape: f32[1,96], index: 4, kind: input, shape index: {}]
  %s5 = inlined_call_operand.vmem [shape: bf16[16,96], index: 5, kind: output, shape index: {}]
  %s6 = sld [smem:[#allocation0]]
  $region30: #{mpu_forward.9} parent=0
    _
  %s8 = ssub.s32 1, %s6
  %s9 = scalar_select 0, %s8, %s6
  // Predicated region
  $region2: #{mpu_forward.9} parent=0 // pred_check
    _
  $region3: #{mpu_forward.9} parent=0 // pred_check_branch
    %11 = sbr.rel (0) target = $region5
  $region4: #{mpu_forward.9} parent=0 // pred_region
    _
  $region5: #{mpu_forward.9} parent=0 // pred_fallthru
    _
  // Predicated region
  $region6: #{mpu_forward.9} parent=0 // pred_check
    _
  $region7: #{mpu_forward.9} parent=0 // pred_check_branch
    %13 = sbr.rel (0) target = $region9
  $region8: #{mpu_forward.9} parent=0 // pred_region
    _
  $region9: #{mpu_forward.9} parent=0 // pred_fallthru
    _
  // Predicated region
  $region10: #{mpu_forward.9} parent=0 // pred_check
    _
  $region11: #{mpu_forward.9} parent=0 // pred_check_branch
    %15 = sbr.rel (0) target = $region13
  $region12: #{mpu_forward.9} parent=0 // pred_region
    _
  $region13: #{mpu_forward.9} parent=0 // pred_fallthru
    _
  // Predicated region
  $region14: #{mpu_forward.9} parent=0 // pred_check
    _
  $region15: #{mpu_forward.9} parent=0 // pred_check_branch
    %17 = sbr.rel (0) target = $region17
  $region16: #{mpu_forward.9} parent=0 // pred_region
    _
  $region17: #{mpu_forward.9} parent=0 // pred_fallthru
    _
  // Predicated region
  $region18: #{mpu_forward.9} parent=0 // pred_check
    _
  $region19: #{mpu_forward.9} parent=0 // pred_check_branch
    %19 = sbr.rel (0) target = $region21
  $region20: #{mpu_forward.9} parent=0 // pred_region
    _
  $region21: #{mpu_forward.9} parent=0 // pred_fallthru
    _
  %v21 = vld [vmem:[%s0] sm:$0xf]
  %v22 = vld [vmem:[%s0 + $0x4] sm:$0xf]
  %v23 = vld [vmem:[%s1] sm:$0xff]
  %v24 = vld [vmem:[%s1 + $0x8] sm:$0xff]
  %v25 = vld [vmem:[%s1 + $0x10] sm:$0xff]
  %v26 = vld [vmem:[%s1 + $0x18] sm:$0xff]
  %v27 = vpack.c.bf16 %v24, %v23
  %v28 = vpack.c.bf16 %v26, %v25
  %v29 = vld [vmem:[%s2] sm:$0x1]
  %v31 = vlaneseq
  %v32 = vshrl.u32 %v31, 7
  %v33 = vsub.s32 0, %v32
  %v34 = vrot.slane %v29, %v33
  %v38 = vunpack.c.l.b16 %v21
  %v39 = vunpack.c.l.b16 %v22
  %v40 = vpack.c.b16 %v39, %v38
  %vm41 = vcmask 261120
  %v43 = vsel %vm41, %v40, 0
  %45 = vmatprep.subr.bf16.mxu0 0
  %46 = vmatpush1.bf16.msra.mxu0 %v27
  %47 = vmatprep.subr.bf16.mxu0 0
  %48 = vmatpush1.bf16.msra.mxu0 %v28
  %49 = vmatprep.subr.bf16.mxu0 0
  %50 = vmatpush1.bf16.msra.mxu0 0
  %51 = vmatprep.subr.bf16.mxu0 0
  %52 = vmatpush1.bf16.msra.mxu0 0
  %53 = vmatprep.subr.bf16.mxu0 0
  %54 = vmatpush1.bf16.msra.mxu0 0
  %55 = vmatprep.subr.bf16.mxu0 0
  %56 = vmatpush1.bf16.msra.mxu0 0
  %57 = vmatprep.subr.bf16.mxu0 0
  %58 = vmatpush1.bf16.msra.mxu0 0
  %59 = vmatprep.subr.bf16.mxu0 0
  %60 = vmatpush1.bf16.msra.mxu0 0
  %61 = vmatprep.subr.bf16.mxu0 0
  %62 = vmatpush1.bf16.msra.mxu0 0
  %63 = vmatprep.subr.bf16.mxu0 0
  %64 = vmatpush1.bf16.msra.mxu0 0
  %65 = vmatprep.subr.bf16.mxu0 0
  %66 = vmatpush1.bf16.msra.mxu0 0
  %67 = vmatprep.subr.bf16.mxu0 0
  %68 = vmatpush1.bf16.msra.mxu0 0
  %69 = vmatprep.subr.bf16.mxu0 0
  %70 = vmatpush1.bf16.msra.mxu0 0
  %71 = vmatprep.subr.bf16.mxu0 0
  %72 = vmatpush1.bf16.msra.mxu0 0
  %73 = vmatprep.subr.bf16.mxu0 0
  %74 = vmatpush1.bf16.msra.mxu0 0
  %75 = vmatprep.subr.bf16.mxu0 0
  %76 = vmatpush1.bf16.msra.mxu0 0
  %77 = vmatprep.mubr.bf16.mxu0 0
  %78 = vmatmul.mubr.bf16.gmra.mrb[0].mxu0 %v43
  %v79 = vpop.f32.mrb[0].mxu0
  %v80 = vadd.f32 %v34, %v79
  %v81 = vpop.f32.mrb[0].mxu0
  %v82 = vpop.f32.mrb[0].mxu0
  %v83 = vadd.f32 %v34, %v82
  %v84 = vpop.f32.mrb[0].mxu0
  %85 = vdwg.mxu0
  %v86 = vpack.c.bf16 %v83, %v80
  %v87 = vld [vmem:[%s3] sm:$0xff]
  %v88 = vld [vmem:[%s3 + $0x8] sm:$0xff]
  %v89 = vld [vmem:[%s3 + $0x10] sm:$0xff]
  %v90 = vld [vmem:[%s3 + $0x18] sm:$0xff]
  %v91 = vpack.c.bf16 %v88, %v87
  %v92 = vpack.c.bf16 %v90, %v89
  %v93 = vld [vmem:[%s4] sm:$0x1]
  %v95 = vlaneseq
  %v96 = vshrl.u32 %v95, 7
  %v97 = vsub.s32 0, %v96
  %v98 = vrot.slane %v93, %v97
  %v101 = vsel %vm41, %v86, 0
  %103 = vmatprep.subr.bf16.mxu0 0
  %104 = vmatpush1.bf16.msra.mxu0 %v91
  %105 = vmatprep.subr.bf16.mxu0 0
  %106 = vmatpush1.bf16.msra.mxu0 %v92
  %107 = vmatprep.subr.bf16.mxu0 0
  %108 = vmatpush1.bf16.msra.mxu0 0
  %109 = vmatprep.subr.bf16.mxu0 0
  %110 = vmatpush1.bf16.msra.mxu0 0
  %111 = vmatprep.subr.bf16.mxu0 0
  %112 = vmatpush1.bf16.msra.mxu0 0
  %113 = vmatprep.subr.bf16.mxu0 0
  %114 = vmatpush1.bf16.msra.mxu0 0
  %115 = vmatprep.subr.bf16.mxu0 0
  %116 = vmatpush1.bf16.msra.mxu0 0
  %117 = vmatprep.subr.bf16.mxu0 0
  %118 = vmatpush1.bf16.msra.mxu0 0
  %119 = vmatprep.subr.bf16.mxu0 0
  %120 = vmatpush1.bf16.msra.mxu0 0
  %121 = vmatprep.subr.bf16.mxu0 0
  %122 = vmatpush1.bf16.msra.mxu0 0
  %123 = vmatprep.subr.bf16.mxu0 0
  %124 = vmatpush1.bf16.msra.mxu0 0
  %125 = vmatprep.subr.bf16.mxu0 0
  %126 = vmatpush1.bf16.msra.mxu0 0
  %127 = vmatprep.subr.bf16.mxu0 0
  %128 = vmatpush1.bf16.msra.mxu0 0
  %129 = vmatprep.subr.bf16.mxu0 0
  %130 = vmatpush1.bf16.msra.mxu0 0
  %131 = vmatprep.subr.bf16.mxu0 0
  %132 = vmatpush1.bf16.msra.mxu0 0
  %133 = vmatprep.subr.bf16.mxu0 0
  %134 = vmatpush1.bf16.msra.mxu0 0
  %135 = vmatprep.mubr.bf16.mxu0 0
  %136 = vmatmul.mubr.bf16.gmra.mrb[0].mxu0 %v101
  %v137 = vpop.f32.mrb[0].mxu0
  %v138 = vadd.f32 %v98, %v137
  %v139 = vpop.f32.mrb[0].mxu0
  %v140 = vpop.f32.mrb[0].mxu0
  %v141 = vadd.f32 %v98, %v140
  %v142 = vpop.f32.mrb[0].mxu0
  %143 = vdwg.mxu0
  %v144 = vpack.c.bf16 %v141, %v138
  %v146 = vunpack.c.l.b16 %v144
  %v147 = vunpack.c.h.b16 %v144
  %v148 = vpack.c.b16 %v146, %v146
  %v149 = vpack.c.b16 %v147, %v147
  %vm152 = vcmask 781312
  %153 = vst.msk [vmem:[%s5] sm:$0xf] %vm152, %v148
  %154 = vst.msk [vmem:[%s5 + $0x4] sm:$0xf] %vm152, %v149
  // Predicated region
  $region22: #{mpu_forward.9} parent=0 // pred_check
    _
  $region23: #{mpu_forward.9} parent=0 // pred_check_branch
    %156 = sbr.rel (0) target = $region25
  $region24: #{mpu_forward.9} parent=0 // pred_region
    _
  $region25: #{mpu_forward.9} parent=0 // pred_fallthru
    _
  // Predicated region
  $region26: #{mpu_forward.9} parent=0 // pred_check
    _
  $region27: #{mpu_forward.9} parent=0 // pred_check_branch
    %158 = sbr.rel (0) target = $region29
  $region28: #{mpu_forward.9} parent=0 // pred_region
    _
  $region29: #{mpu_forward.9} parent=0 // pred_fallthru
    _

// kernel: mpu_forward.8
$region0: #{mpu_forward.8}
  #allocation0 [shape = 'u32[]', space=smem, size = 0x4, offset = 0x4, fixed_abs, tag = 'smem constant byte address 0x4 - core index']
  #allocation1 [shape = 'u32[144,128]{1,0:T(1,128)}', space=vmem, size = 0x12000, scoped, tag = 'internal scratch']
  %s0 = inlined_call_operand.vmem [shape: bf16[8,8,8], index: 0, kind: input, shape index: {}]
  %s1 = inlined_call_operand.vmem [shape: bf16[8,16,8], index: 1, kind: input, shape index: {}]
  %s2 = inlined_call_operand.vmem [shape: bf16[8,16,8], index: 2, kind: input, shape index: {}]
  %s3 = inlined_call_operand.vmem [shape: bf16[8,8,8], index: 3, kind: output, shape index: {}]
  %s4 = sld [smem:[#allocation0]]
  $region45: #{mpu_forward.8} parent=0
    _
  %s6 = ssub.s32 1, %s4
  %s7 = scalar_select 0, %s6, %s4
  loop: start=0, step=1, limit=4
  $region2: #{mpu_forward.8} parent=0 // loop_pre_header
    _
  $region3: #{mpu_forward.8} parent=0 // loop_header
    %s9 = sphi 0, %s13
    %p10 = scmp.ge.s32.totalorder %s9, 4
    %s16 = sphi 0, %s28
    %s17 = sphi 0, %s24
    %s18 = sphi 0, %s16
    %s19 = sphi 0, %s17
    %s20 = sphi 0, %s18
    %s21 = sphi 0, %s19
    %s33 = sphi 0, %s35
    %s36 = sphi 0, %s33
    %s37 = sphi 0, %s36
    %s53 = sphi 0, %s37
    %s59 = sphi 0, %s61
    %s62 = sphi 0, %s59
    %s63 = sphi 0, %s62
    %s79 = sphi 0, %s63
    %s85 = sphi 0, %s87
    %s88 = sphi 0, %s85
    %s89 = sphi 0, %s88
    %s105 = sphi 0, %s89
    %s113 = sphi 0, %s115
    %s116 = sphi 0, %s113
    %s117 = sphi 0, %s116
    %s133 = sphi 0, %s117
  $region4: #{mpu_forward.8} parent=0 // loop_header_branch
    %12 = sbr.rel (%p10) target = $region8
  $region5: #{mpu_forward.8} parent=0 // loop_body
    %s14 = ssub.s32 %s9, 1
    %s15 = ssub.s32 %s9, 2
    %s22 = sadd.s32 1, %s17
    %p23 = scmp.ge.s32.totalorder %s22, 1
    %s24 = scalar_select %p23, 0, %s22
    %s25 = sadd.s32 1, %s16
    %s26 = scalar_select %p23, %s25, %s16
    %p27 = scmp.ge.s32.totalorder %s26, 2
    %s28 = scalar_select %p27, 0, %s26
    %s29 = ssub.s32 %s16, %s28
    %s30 = ssub.s32 %s17, %s24
    %s31 = sor.u32 %s29, %s30
    %p32 = scmp.eq.s32.totalorder %s31, 0
    %s34 = sadd.s32 %s33, 1
    %s35 = scalar_select %p32, %s33, %s34
    %p38 = pneg %p32
    %p39 = scmp.eq.s32.totalorder %s9, 1
    %p40 = por %p38, %p39
    %p41 = scmp.ne.s32.totalorder %s33, %s36
    %p42 = scmp.eq.s32.totalorder %s9, 0
    %p43 = por %p41, %p42
    %p44 = scmp.ne.s32.totalorder %s33, %s36
    %p45 = scmp.eq.s32.totalorder %s14, 1
    %p46 = por %p44, %p45
    %p47 = scmp.ne.s32.totalorder %s36, %s37
    %p48 = scmp.eq.s32.totalorder %s14, 0
    %p49 = por %p47, %p48
    %p50 = scmp.ne.s32.totalorder %s36, %s37
    %p51 = scmp.eq.s32.totalorder %s15, 1
    %p52 = por %p50, %p51
    %p54 = scmp.ne.s32.totalorder %s37, %s53
    %p55 = scmp.eq.s32.totalorder %s15, 0
    %p56 = por %p54, %p55
    %s57 = ssub.s32 %s16, %s28
    %p58 = scmp.eq.s32.totalorder %s57, 0
    %s60 = sadd.s32 %s59, 1
    %s61 = scalar_select %p58, %s59, %s60
    %p64 = pneg %p58
    %p65 = scmp.eq.s32.totalorder %s9, 1
    %p66 = por %p64, %p65
    %p67 = scmp.ne.s32.totalorder %s59, %s62
    %p68 = scmp.eq.s32.totalorder %s9, 0
    %p69 = por %p67, %p68
    %p70 = scmp.ne.s32.totalorder %s59, %s62
    %p71 = scmp.eq.s32.totalorder %s14, 1
    %p72 = por %p70, %p71
    %p73 = scmp.ne.s32.totalorder %s62, %s63
    %p74 = scmp.eq.s32.totalorder %s14, 0
    %p75 = por %p73, %p74
    %p76 = scmp.ne.s32.totalorder %s62, %s63
    %p77 = scmp.eq.s32.totalorder %s15, 1
    %p78 = por %p76, %p77
    %p80 = scmp.ne.s32.totalorder %s63, %s79
    %p81 = scmp.eq.s32.totalorder %s15, 0
    %p82 = por %p80, %p81
    %s83 = ssub.s32 %s16, %s28
    %p84 = scmp.eq.s32.totalorder %s83, 0
    %s86 = sadd.s32 %s85, 1
    %s87 = scalar_select %p84, %s85, %s86
    %p90 = pneg %p84
    %p91 = scmp.eq.s32.totalorder %s9, 1
    %p92 = por %p90, %p91
    %p93 = scmp.ne.s32.totalorder %s85, %s88
    %p94 = scmp.eq.s32.totalorder %s9, 0
    %p95 = por %p93, %p94
    %p96 = scmp.ne.s32.totalorder %s85, %s88
    %p97 = scmp.eq.s32.totalorder %s14, 1
    %p98 = por %p96, %p97
    %p99 = scmp.ne.s32.totalorder %s88, %s89
    %p100 = scmp.eq.s32.totalorder %s14, 0
    %p101 = por %p99, %p100
    %p102 = scmp.ne.s32.totalorder %s88, %s89
    %p103 = scmp.eq.s32.totalorder %s15, 1
    %p104 = por %p102, %p103
    %p106 = scmp.ne.s32.totalorder %s89, %s105
    %p107 = scmp.eq.s32.totalorder %s15, 0
    %p108 = por %p106, %p107
    %s109 = ssub.s32 %s16, %s28
    %s110 = ssub.s32 %s17, %s24
    %s111 = sor.u32 %s109, %s110
    %p112 = scmp.eq.s32.totalorder %s111, 0
    %s114 = sadd.s32 %s113, 1
    %s115 = scalar_select %p112, %s113, %s114
    %p118 = pneg %p112
    %p119 = scmp.eq.s32.totalorder %s9, 1
    %p120 = por %p118, %p119
    %p121 = scmp.ne.s32.totalorder %s113, %s116
    %p122 = scmp.eq.s32.totalorder %s9, 0
    %p123 = por %p121, %p122
    %p124 = scmp.ne.s32.totalorder %s113, %s116
    %p125 = scmp.eq.s32.totalorder %s14, 1
    %p126 = por %p124, %p125
    %p127 = scmp.ne.s32.totalorder %s116, %s117
    %p128 = scmp.eq.s32.totalorder %s14, 0
    %p129 = por %p127, %p128
    %p130 = scmp.ne.s32.totalorder %s116, %s117
    %p131 = scmp.eq.s32.totalorder %s15, 1
    %p132 = por %p130, %p131
    %p134 = scmp.ne.s32.totalorder %s117, %s133
    %p135 = scmp.eq.s32.totalorder %s15, 0
    %p136 = por %p134, %p135
    %p137 = scmp.le.s32.totalorder 1, %s9
    %p138 = scmp.lt.s32.totalorder %s9, 3
    %p139 = pnand %p137, %p138
    %p140 = pneg %p139
    // Predicated region
    $region9: #{mpu_forward.8} parent=5 // pred_check
      _
    $region10: #{mpu_forward.8} parent=5 // pred_check_branch
      %142 = sbr.rel (%p139) target = $region12
    $region11: #{mpu_forward.8} parent=5 // pred_region
      %s143 = ssub.s32 %s9, 1
    $region12: #{mpu_forward.8} parent=5 // pred_fallthru
      _
    %p144 = scmp.lt.s32.totalorder %s9, 2
    // Predicated region
    $region13: #{mpu_forward.8} parent=5 // pred_check
      %p145 = pneg %p144
    $region14: #{mpu_forward.8} parent=5 // pred_check_branch
      %147 = sbr.rel (%p145) target = $region16
    $region15: #{mpu_forward.8} parent=5 // pred_region
      // Predicated region
      $region17: #{mpu_forward.8} parent=15 // pred_check
        %p148 = pneg %p43
      $region18: #{mpu_forward.8} parent=15 // pred_check_branch
        %150 = sbr.rel (%p148) target = $region20
      $region19: #{mpu_forward.8} parent=15 // pred_region
        %s151 = smul.u32 4, %s16
        %p152 = scmp.lt.s32.totalorder %s151, 7
        %s153 = scalar_select %p152, %s151, 7
        %p154 = scmp.lt.s32.totalorder %s17, 0
        %s155 = scalar_select %p154, %s17, 0
        %s156 = sadd.s32 %s155, %s153
        %s157 = smul.addr %s156, 4
        %s158 = scalar_lea.vmem %s0, %s157
        %s159 = smul.u32 4, %s16
      $region20: #{mpu_forward.8} parent=15 // pred_fallthru
        _
      // Predicated region
      $region21: #{mpu_forward.8} parent=15 // pred_check
        %p160 = pneg %p69
      $region22: #{mpu_forward.8} parent=15 // pred_check_branch
        %162 = sbr.rel (%p160) target = $region24
      $region23: #{mpu_forward.8} parent=15 // pred_region
        %s163 = smul.u32 4, %s16
        %p164 = scmp.lt.s32.totalorder %s163, 7
        %s165 = scalar_select %p164, %s163, 7
        %s166 = smul.addr %s165, 2
        %s167 = smul.addr %s166, 4
        %s168 = scalar_lea.vmem %s1, %s167
        %s169 = smul.u32 4, %s16
      $region24: #{mpu_forward.8} parent=15 // pred_fallthru
        _
      // Predicated region
      $region25: #{mpu_forward.8} parent=15 // pred_check
        %p170 = pneg %p95
      $region26: #{mpu_forward.8} parent=15 // pred_check_branch
        %172 = sbr.rel (%p170) target = $region28
      $region27: #{mpu_forward.8} parent=15 // pred_region
        %s173 = smul.u32 4, %s16
        %p174 = scmp.lt.s32.totalorder %s173, 7
        %s175 = scalar_select %p174, %s173, 7
        %s176 = smul.addr %s175, 2
        %s177 = smul.addr %s176, 4
        %s178 = scalar_lea.vmem %s2, %s177
        %s179 = smul.u32 4, %s16
      $region28: #{mpu_forward.8} parent=15 // pred_fallthru
        _
    $region16: #{mpu_forward.8} parent=5 // pred_fallthru
      _
    %p180 = scmp.le.s32.totalorder 1, %s9
    %p181 = scmp.lt.s32.totalorder %s9, 3
    %p182 = pnand %p180, %p181
    %p183 = pneg %p182
    // Predicated region
    $region29: #{mpu_forward.8} parent=5 // pred_check
      _
    $region30: #{mpu_forward.8} parent=5 // pred_check_branch
      %185 = sbr.rel (%p182) target = $region32
    $region31: #{mpu_forward.8} parent=5 // pred_region
      %s186 = ssub.s32 %s9, 1
      %s187 = smul.u32 4, %s18
      %p188 = scmp.lt.s32.totalorder %s187, 7
      %s189 = scalar_select %p188, %s187, 7
      %p190 = scmp.lt.s32.totalorder %s19, 0
      %s191 = scalar_select %p190, %s19, 0
      %s192 = sadd.s32 %s191, %s189
      %s193 = smul.addr %s192, 4
      %s194 = scalar_lea.vmem %s0, %s193
      %p195 = pneg %p49
      %p196 = pneg %p46
      %s197 = smul.u32 4, %s18
      %p198 = scmp.lt.s32.totalorder %s197, 7
      %s199 = scalar_select %p198, %s197, 7
      %s200 = smul.addr %s199, 2
      %s201 = smul.addr %s200, 4
      %s202 = scalar_lea.vmem %s1, %s201
      %p203 = pneg %p75
      %p204 = pneg %p72
      %s205 = smul.u32 4, %s18
      %p206 = scmp.lt.s32.totalorder %s205, 7
      %s207 = scalar_select %p206, %s205, 7
      %s208 = smul.addr %s207, 2
      %s209 = smul.addr %s208, 4
      %s210 = scalar_lea.vmem %s2, %s209
      %p211 = pneg %p101
      %p212 = pneg %p98
      %p213 = pneg %p129
      %p214 = pneg %p126
      %s215 = smul.u32 4, %s18
      %p216 = scmp.lt.s32.totalorder %s215, 7
      %s217 = scalar_select %p216, %s215, 7
      %p218 = scmp.lt.s32.totalorder %s19, 0
      %s219 = scalar_select %p218, %s19, 0
      %s220 = sadd.s32 %s219, %s217
      %s221 = smul.addr %s220, 4
      %s222 = scalar_lea.vmem %s3, %s221
      %s223 = smul.u32 4, %s18
      %p224 = scmp.lt.s32.totalorder %s223, 7
      %s225 = scalar_select %p224, %s223, 7
      %p226 = scmp.lt.s32.totalorder %s19, 0
      %s227 = scalar_select %p226, %s19, 0
      %s228 = sadd.s32 %s227, %s225
      %s229 = smul.addr %s228, 4
      %s230 = scalar_lea.vmem %s0, %s229
      %s231 = smul.u32 4, %s18
      %s232 = smul.u32 4, %s18
      %p233 = scmp.lt.s32.totalorder %s232, 7
      %s234 = scalar_select %p233, %s232, 7
      %s235 = smul.addr %s234, 2
      %s236 = smul.addr %s235, 4
      %s237 = scalar_lea.vmem %s1, %s236
      %s238 = smul.u32 4, %s18
      %s239 = smul.u32 4, %s18
      %p240 = scmp.lt.s32.totalorder %s239, 7
      %s241 = scalar_select %p240, %s239, 7
      %s242 = smul.addr %s241, 2
      %s243 = smul.addr %s242, 4
      %s244 = scalar_lea.vmem %s2, %s243
      %s245 = smul.u32 4, %s18
      %s246 = smul.u32 4, %s18
      %p247 = scmp.lt.s32.totalorder %s246, 7
      %s248 = scalar_select %p247, %s246, 7
      %p249 = scmp.lt.s32.totalorder %s19, 0
      %s250 = scalar_select %p249, %s19, 0
      %s251 = sadd.s32 %s250, %s248
      %s252 = smul.addr %s251, 4
      %s253 = scalar_lea.vmem %s3, %s252
      %s254 = smul.u32 4, %s18
      %v256 = vld [vmem:[%s230] sm:$0xf]
      %v257 = vld [vmem:[%s230 + $0x4] sm:$0xf]
      %v258 = vld [vmem:[%s230 + $0x8] sm:$0xf]
      %v259 = vld [vmem:[%s230 + $0xc] sm:$0xf]
      %v260 = vld [vmem:[%s237] sm:$0xf]
      %v261 = vld [vmem:[%s237 + $0x4] sm:$0xf]
      %v262 = vld [vmem:[%s237 + $0x8] sm:$0xf]
      %v263 = vld [vmem:[%s237 + $0xc] sm:$0xf]
      %v264 = vld [vmem:[%s237 + $0x10] sm:$0xf]
      %v265 = vld [vmem:[%s237 + $0x14] sm:$0xf]
      %v266 = vld [vmem:[%s237 + $0x18] sm:$0xf]
      %v267 = vld [vmem:[%s237 + $0x1c] sm:$0xf]
      %v270 = vunpack.c.l.b16 %v260
      %v271 = vunpack.c.l.b16 %v261
      %v272 = vpack.c.b16 %v271, %v270
      %vm273 = vcmask 64512
      %v275 = vsel %vm273, %v256, 0
      %v278 = vsel %vm273, %v272, 0
      %280 = vmatprep.subr.bf16.mxu0 0
      %281 = vmatpush1.bf16.xpose.msra.mxu0 %v278
      %282 = vmatprep.subr.bf16.mxu0 0
      %283 = vmatpush1.bf16.xpose.msra.mxu0 0
      %284 = vmatprep.subr.bf16.mxu0 0
      %285 = vmatpush1.bf16.xpose.msra.mxu0 0
      %286 = vmatprep.subr.bf16.mxu0 0
      %287 = vmatpush1.bf16.xpose.msra.mxu0 0
      %288 = vmatprep.subr.bf16.mxu0 0
      %289 = vmatpush1.bf16.xpose.msra.mxu0 0
      %290 = vmatprep.subr.bf16.mxu0 0
      %291 = vmatpush1.bf16.xpose.msra.mxu0 0
      %292 = vmatprep.subr.bf16.mxu0 0
      %293 = vmatpush1.bf16.xpose.msra.mxu0 0
      %294 = vmatprep.subr.bf16.mxu0 0
      %295 = vmatpush1.bf16.xpose.msra.mxu0 0
      %296 = vmatprep.subr.bf16.mxu0 0
      %297 = vmatpush1.bf16.xpose.msra.mxu0 0
      %298 = vmatprep.subr.bf16.mxu0 0
      %299 = vmatpush1.bf16.xpose.msra.mxu0 0
      %300 = vmatprep.subr.bf16.mxu0 0
      %301 = vmatpush1.bf16.xpose.msra.mxu0 0
      %302 = vmatprep.subr.bf16.mxu0 0
      %303 = vmatpush1.bf16.xpose.msra.mxu0 0
      %304 = vmatprep.subr.bf16.mxu0 0
      %305 = vmatpush1.bf16.xpose.msra.mxu0 0
      %306 = vmatprep.subr.bf16.mxu0 0
      %307 = vmatpush1.bf16.xpose.msra.mxu0 0
      %308 = vmatprep.subr.bf16.mxu0 0
      %309 = vmatpush1.bf16.xpose.msra.mxu0 0
      %310 = vmatprep.subr.bf16.mxu0 0
      %311 = vmatpush1.bf16.xpose.msra.mxu0 0
      %312 = vmatprep.mubr.bf16.mxu0 0
      %313 = vmatmul.mubr.bf16.gmra.mrb[0].mxu0 %v275
      %v314 = vpop.f32.mrb[0].mxu0
      %v315 = vadd.f32 0.0, %v314
      %v316 = vpop.f32.mrb[0].mxu0
      %v317 = vpop.f32.mrb[0].mxu0
      %v318 = vpop.f32.mrb[0].mxu0
      %319 = vdwg.mxu0
      %v322 = vunpack.c.l.b16 %v262
      %v323 = vunpack.c.l.b16 %v263
      %v324 = vpack.c.b16 %v323, %v322
      %v326 = vsel %vm273, %v257, 0
      %v329 = vsel %vm273, %v324, 0
      %331 = vmatprep.subr.bf16.mxu0 0
      %332 = vmatpush1.bf16.xpose.msra.mxu0 %v329
      %333 = vmatprep.subr.bf16.mxu0 0
      %334 = vmatpush1.bf16.xpose.msra.mxu0 0
      %335 = vmatprep.subr.bf16.mxu0 0
      %336 = vmatpush1.bf16.xpose.msra.mxu0 0
      %337 = vmatprep.subr.bf16.mxu0 0
      %338 = vmatpush1.bf16.xpose.msra.mxu0 0
      %339 = vmatprep.subr.bf16.mxu0 0
      %340 = vmatpush1.bf16.xpose.msra.mxu0 0
      %341 = vmatprep.subr.bf16.mxu0 0
      %342 = vmatpush1.bf16.xpose.msra.mxu0 0
      %343 = vmatprep.subr.bf16.mxu0 0
      %344 = vmatpush1.bf16.xpose.msra.mxu0 0
      %345 = vmatprep.subr.bf16.mxu0 0
      %346 = vmatpush1.bf16.xpose.msra.mxu0 0
      %347 = vmatprep.subr.bf16.mxu0 0
      %348 = vmatpush1.bf16.xpose.msra.mxu0 0
      %349 = vmatprep.subr.bf16.mxu0 0
      %350 = vmatpush1.bf16.xpose.msra.mxu0 0
      %351 = vmatprep.subr.bf16.mxu0 0
      %352 = vmatpush1.bf16.xpose.msra.mxu0 0
      %353 = vmatprep.subr.bf16.mxu0 0
      %354 = vmatpush1.bf16.xpose.msra.mxu0 0
      %355 = vmatprep.subr.bf16.mxu0 0
      %356 = vmatpush1.bf16.xpose.msra.mxu0 0
      %357 = vmatprep.subr.bf16.mxu0 0
      %358 = vmatpush1.bf16.xpose.msra.mxu0 0
      %359 = vmatprep.subr.bf16.mxu0 0
      %360 = vmatpush1.bf16.xpose.msra.mxu0 0
      %361 = vmatprep.subr.bf16.mxu0 0
      %362 = vmatpush1.bf16.xpose.msra.mxu0 0
      %363 = vmatprep.mubr.bf16.mxu0 0
      %364 = vmatmul.mubr.bf16.gmra.mrb[0].mxu0 %v326
      %v365 = vpop.f32.mrb[0].mxu0
      %v366 = vadd.f32 0.0, %v365
      %v367 = vpop.f32.mrb[0].mxu0
      %v368 = vpop.f32.mrb[0].mxu0
      %v369 = vpop.f32.mrb[0].mxu0
      %370 = vdwg.mxu0
      %v373 = vunpack.c.l.b16 %v264
      %v374 = vunpack.c.l.b16 %v265
      %v375 = vpack.c.b16 %v374, %v373
      %v377 = vsel %vm273, %v258, 0
      %v380 = vsel %vm273, %v375, 0
      %382 = vmatprep.subr.bf16.mxu0 0
      %383 = vmatpush1.bf16.xpose.msra.mxu0 %v380
      %384 = vmatprep.subr.bf16.mxu0 0
      %385 = vmatpush1.bf16.xpose.msra.mxu0 0
      %386 = vmatprep.subr.bf16.mxu0 0
      %387 = vmatpush1.bf16.xpose.msra.mxu0 0
      %388 = vmatprep.subr.bf16.mxu0 0
      %389 = vmatpush1.bf16.xpose.msra.mxu0 0
      %390 = vmatprep.subr.bf16.mxu0 0
      %391 = vmatpush1.bf16.xpose.msra.mxu0 0
      %392 = vmatprep.subr.bf16.mxu0 0
      %393 = vmatpush1.bf16.xpose.msra.mxu0 0
      %394 = vmatprep.subr.bf16.mxu0 0
      %395 = vmatpush1.bf16.xpose.msra.mxu0 0
      %396 = vmatprep.subr.bf16.mxu0 0
      %397 = vmatpush1.bf16.xpose.msra.mxu0 0
      %398 = vmatprep.subr.bf16.mxu0 0
      %399 = vmatpush1.bf16.xpose.msra.mxu0 0
      %400 = vmatprep.subr.bf16.mxu0 0
      %401 = vmatpush1.bf16.xpose.msra.mxu0 0
      %402 = vmatprep.subr.bf16.mxu0 0
      %403 = vmatpush1.bf16.xpose.msra.mxu0 0
      %404 = vmatprep.subr.bf16.mxu0 0
      %405 = vmatpush1.bf16.xpose.msra.mxu0 0
      %406 = vmatprep.subr.bf16.mxu0 0
      %407 = vmatpush1.bf16.xpose.msra.mxu0 0
      %408 = vmatprep.subr.bf16.mxu0 0
      %409 = vmatpush1.bf16.xpose.msra.mxu0 0
      %410 = vmatprep.subr.bf16.mxu0 0
      %411 = vmatpush1.bf16.xpose.msra.mxu0 0
      %412 = vmatprep.subr.bf16.mxu0 0
      %413 = vmatpush1.bf16.xpose.msra.mxu0 0
      %414 = vmatprep.mubr.bf16.mxu0 0
      %415 = vmatmul.mubr.bf16.gmra.mrb[0].mxu0 %v377
      %v416 = vpop.f32.mrb[0].mxu0
      %v417 = vadd.f32 0.0, %v416
      %v418 = vpop.f32.mrb[0].mxu0
      %v419 = vpop.f32.mrb[0].mxu0
      %v420 = vpop.f32.mrb[0].mxu0
      %421 = vdwg.mxu0
      %v424 = vunpack.c.l.b16 %v266
      %v425 = vunpack.c.l.b16 %v267
      %v426 = vpack.c.b16 %v425, %v424
      %v428 = vsel %vm273, %v259, 0
      %v431 = vsel %vm273, %v426, 0
      %433 = vmatprep.subr.bf16.mxu0 0
      %434 = vmatpush1.bf16.xpose.msra.mxu0 %v431
      %435 = vmatprep.subr.bf16.mxu0 0
      %436 = vmatpush1.bf16.xpose.msra.mxu0 0
      %437 = vmatprep.subr.bf16.mxu0 0
      %438 = vmatpush1.bf16.xpose.msra.mxu0 0
      %439 = vmatprep.subr.bf16.mxu0 0
      %440 = vmatpush1.bf16.xpose.msra.mxu0 0
      %441 = vmatprep.subr.bf16.mxu0 0
      %442 = vmatpush1.bf16.xpose.msra.mxu0 0
      %443 = vmatprep.subr.bf16.mxu0 0
      %444 = vmatpush1.bf16.xpose.msra.mxu0 0
      %445 = vmatprep.subr.bf16.mxu0 0
      %446 = vmatpush1.bf16.xpose.msra.mxu0 0
      %447 = vmatprep.subr.bf16.mxu0 0
      %448 = vmatpush1.bf16.xpose.msra.mxu0 0
      %449 = vmatprep.subr.bf16.mxu0 0
      %450 = vmatpush1.bf16.xpose.msra.mxu0 0
      %451 = vmatprep.subr.bf16.mxu0 0
      %452 = vmatpush1.bf16.xpose.msra.mxu0 0
      %453 = vmatprep.subr.bf16.mxu0 0
      %454 = vmatpush1.bf16.xpose.msra.mxu0 0
      %455 = vmatprep.subr.bf16.mxu0 0
      %456 = vmatpush1.bf16.xpose.msra.mxu0 0
      %457 = vmatprep.subr.bf16.mxu0 0
      %458 = vmatpush1.bf16.xpose.msra.mxu0 0
      %459 = vmatprep.subr.bf16.mxu0 0
      %460 = vmatpush1.bf16.xpose.msra.mxu0 0
      %461 = vmatprep.subr.bf16.mxu0 0
      %462 = vmatpush1.bf16.xpose.msra.mxu0 0
      %463 = vmatprep.subr.bf16.mxu0 0
      %464 = vmatpush1.bf16.xpose.msra.mxu0 0
      %465 = vmatprep.mubr.bf16.mxu0 0
      %466 = vmatmul.mubr.bf16.gmra.mrb[0].mxu0 %v428
      %v467 = vpop.f32.mrb[0].mxu0
      %v468 = vadd.f32 0.0, %v467
      %v469 = vpop.f32.mrb[0].mxu0
      %v470 = vpop.f32.mrb[0].mxu0
      %v471 = vpop.f32.mrb[0].mxu0
      %472 = vdwg.mxu0
      %vm473 = vcmask 130048
      %v474 = vsel %vm473, %v315, -inf
      %475 = vmax.xlane.f32.xlu0 %v474
      %v476 = vpop.xlane.xlu0 %475
      %v477 = vsel %vm473, %v366, -inf
      %478 = vmax.xlane.f32.xlu0 %v477
      %v479 = vpop.xlane.xlu0 %478
      %v480 = vsel %vm473, %v417, -inf
      %481 = vmax.xlane.f32.xlu0 %v480
      %v482 = vpop.xlane.xlu0 %481
      %v483 = vsel %vm473, %v468, -inf
      %484 = vmax.xlane.f32.xlu0 %v483
      %v485 = vpop.xlane.xlu0 %484
      %v486 = vsub.f32 %v315, %v476
      %v487 = vsub.f32 %v366, %v479
      %v488 = vsub.f32 %v417, %v482
      %v489 = vsub.f32 %v468, %v485
      %v490 = vmul.f32 %v486, 1.442695
      %v491 = vpow.pop %v490
      %v492 = vmul.f32 %v487, 1.442695
      %v493 = vpow.pop %v492
      %v494 = vmul.f32 %v488, 1.442695
      %v495 = vpow.pop %v494
      %v496 = vmul.f32 %v489, 1.442695
      %v497 = vpow.pop %v496
      %v498 = vsel %vm473, %v491, 0.0
      %499 = vadd.xlane.f32.xlu0 %v498
      %v500 = vpop.xlane.xlu0 %499
      %v501 = vsel %vm473, %v493, 0.0
      %502 = vadd.xlane.f32.xlu0 %v501
      %v503 = vpop.xlane.xlu0 %502
      %v504 = vsel %vm473, %v495, 0.0
      %505 = vadd.xlane.f32.xlu0 %v504
      %v506 = vpop.xlane.xlu0 %505
      %v507 = vsel %vm473, %v497, 0.0
      %508 = vadd.xlane.f32.xlu0 %v507
      %v509 = vpop.xlane.xlu0 %508
      %v510 = vrcp.pop %v500
      %v511 = vrcp.pop %v503
      %v512 = vrcp.pop %v506
      %v513 = vrcp.pop %v509
      %v514 = vmul.f32 %v491, %v510
      %v515 = vmul.f32 %v493, %v511
      %v516 = vmul.f32 %v495, %v512
      %v517 = vmul.f32 %v497, %v513
      %v518 = vpack.c.bf16 %v514, %v514
      %v519 = vpack.c.bf16 %v515, %v515
      %v520 = vpack.c.bf16 %v516, %v516
      %v521 = vpack.c.bf16 %v517, %v517
      %v522 = vld [vmem:[%s244] sm:$0xf]
      %v523 = vld [vmem:[%s244 + $0x4] sm:$0xf]
      %v524 = vld [vmem:[%s244 + $0x8] sm:$0xf]
      %v525 = vld [vmem:[%s244 + $0xc] sm:$0xf]
      %v526 = vld [vmem:[%s244 + $0x10] sm:$0xf]
      %v527 = vld [vmem:[%s244 + $0x14] sm:$0xf]
      %v528 = vld [vmem:[%s244 + $0x18] sm:$0xf]
      %v529 = vld [vmem:[%s244 + $0x1c] sm:$0xf]
      %v532 = vunpack.c.l.b16 %v522
      %v533 = vunpack.c.l.b16 %v523
      %v534 = vpack.c.b16 %v533, %v532
      %v537 = vsel %vm473, %v518, 0
      %539 = vmatprep.subr.bf16.mxu0 0
      %540 = vmatpush1.bf16.msra.mxu0 %v534
      %541 = vmatprep.subr.bf16.mxu0 0
      %542 = vmatpush1.bf16.msra.mxu0 0
      %543 = vmatprep.subr.bf16.mxu0 0
      %544 = vmatpush1.bf16.msra.mxu0 0
      %545 = vmatprep.subr.bf16.mxu0 0
      %546 = vmatpush1.bf16.msra.mxu0 0
      %547 = vmatprep.subr.bf16.mxu0 0
      %548 = vmatpush1.bf16.msra.mxu0 0
      %549 = vmatprep.subr.bf16.mxu0 0
      %550 = vmatpush1.bf16.msra.mxu0 0
      %551 = vmatprep.subr.bf16.mxu0 0
      %552 = vmatpush1.bf16.msra.mxu0 0
      %553 = vmatprep.subr.bf16.mxu0 0
      %554 = vmatpush1.bf16.msra.mxu0 0
      %555 = vmatprep.subr.bf16.mxu0 0
      %556 = vmatpush1.bf16.msra.mxu0 0
      %557 = vmatprep.subr.bf16.mxu0 0
      %558 = vmatpush1.bf16.msra.mxu0 0
      %559 = vmatprep.subr.bf16.mxu0 0
      %560 = vmatpush1.bf16.msra.mxu0 0
      %561 = vmatprep.subr.bf16.mxu0 0
      %562 = vmatpush1.bf16.msra.mxu0 0
      %563 = vmatprep.subr.bf16.mxu0 0
      %564 = vmatpush1.bf16.msra.mxu0 0
      %565 = vmatprep.subr.bf16.mxu0 0
      %566 = vmatpush1.bf16.msra.mxu0 0
      %567 = vmatprep.subr.bf16.mxu0 0
      %568 = vmatpush1.bf16.msra.mxu0 0
      %569 = vmatprep.subr.bf16.mxu0 0
      %570 = vmatpush1.bf16.msra.mxu0 0
      %571 = vmatprep.mubr.bf16.mxu0 0
      %572 = vmatmul.mubr.bf16.gmra.mrb[0].mxu0 %v537
      %v573 = vpop.f32.mrb[0].mxu0
      %v574 = vadd.f32 0.0, %v573
      %v575 = vpop.f32.mrb[0].mxu0
      %v576 = vpop.f32.mrb[0].mxu0
      %v577 = vpop.f32.mrb[0].mxu0
      %578 = vdwg.mxu0
      %v581 = vunpack.c.l.b16 %v524
      %v582 = vunpack.c.l.b16 %v525
      %v583 = vpack.c.b16 %v582, %v581
      %v586 = vsel %vm473, %v519, 0
      %588 = vmatprep.subr.bf16.mxu0 0
      %589 = vmatpush1.bf16.msra.mxu0 %v583
      %590 = vmatprep.subr.bf16.mxu0 0
      %591 = vmatpush1.bf16.msra.mxu0 0
      %592 = vmatprep.subr.bf16.mxu0 0
      %593 = vmatpush1.bf16.msra.mxu0 0
      %594 = vmatprep.subr.bf16.mxu0 0
      %595 = vmatpush1.bf16.msra.mxu0 0
      %596 = vmatprep.subr.bf16.mxu0 0
      %597 = vmatpush1.bf16.msra.mxu0 0
      %598 = vmatprep.subr.bf16.mxu0 0
      %599 = vmatpush1.bf16.msra.mxu0 0
      %600 = vmatprep.subr.bf16.mxu0 0
      %601 = vmatpush1.bf16.msra.mxu0 0
      %602 = vmatprep.subr.bf16.mxu0 0
      %603 = vmatpush1.bf16.msra.mxu0 0
      %604 = vmatprep.subr.bf16.mxu0 0
      %605 = vmatpush1.bf16.msra.mxu0 0
      %606 = vmatprep.subr.bf16.mxu0 0
      %607 = vmatpush1.bf16.msra.mxu0 0
      %608 = vmatprep.subr.bf16.mxu0 0
      %609 = vmatpush1.bf16.msra.mxu0 0
      %610 = vmatprep.subr.bf16.mxu0 0
      %611 = vmatpush1.bf16.msra.mxu0 0
      %612 = vmatprep.subr.bf16.mxu0 0
      %613 = vmatpush1.bf16.msra.mxu0 0
      %614 = vmatprep.subr.bf16.mxu0 0
      %615 = vmatpush1.bf16.msra.mxu0 0
      %616 = vmatprep.subr.bf16.mxu0 0
      %617 = vmatpush1.bf16.msra.mxu0 0
      %618 = vmatprep.subr.bf16.mxu0 0
      %619 = vmatpush1.bf16.msra.mxu0 0
      %620 = vmatprep.mubr.bf16.mxu0 0
      %621 = vmatmul.mubr.bf16.gmra.mrb[0].mxu0 %v586
      %v622 = vpop.f32.mrb[0].mxu0
      %v623 = vadd.f32 0.0, %v622
      %v624 = vpop.f32.mrb[0].mxu0
      %v625 = vpop.f32.mrb[0].mxu0
      %v626 = vpop.f32.mrb[0].mxu0
      %627 = vdwg.mxu0
      %v630 = vunpack.c.l.b16 %v526
      %v631 = vunpack.c.l.b16 %v527
      %v632 = vpack.c.b16 %v631, %v630
      %v635 = vsel %vm473, %v520, 0
      %637 = vmatprep.subr.bf16.mxu0 0
      %638 = vmatpush1.bf16.msra.mxu0 %v632
      %639 = vmatprep.subr.bf16.mxu0 0
      %640 = vmatpush1.bf16.msra.mxu0 0
      %641 = vmatprep.subr.bf16.mxu0 0
      %642 = vmatpush1.bf16.msra.mxu0 0
      %643 = vmatprep.subr.bf16.mxu0 0
      %644 = vmatpush1.bf16.msra.mxu0 0
      %645 = vmatprep.subr.bf16.mxu0 0
      %646 = vmatpush1.bf16.msra.mxu0 0
      %647 = vmatprep.subr.bf16.mxu0 0
      %648 = vmatpush1.bf16.msra.mxu0 0
      %649 = vmatprep.subr.bf16.mxu0 0
      %650 = vmatpush1.bf16.msra.mxu0 0
      %651 = vmatprep.subr.bf16.mxu0 0
      %652 = vmatpush1.bf16.msra.mxu0 0
      %653 = vmatprep.subr.bf16.mxu0 0
      %654 = vmatpush1.bf16.msra.mxu0 0
      %655 = vmatprep.subr.bf16.mxu0 0
      %656 = vmatpush1.bf16.msra.mxu0 0
      %657 = vmatprep.subr.bf16.mxu0 0
      %658 = vmatpush1.bf16.msra.mxu0 0
      %659 = vmatprep.subr.bf16.mxu0 0
      %660 = vmatpush1.bf16.msra.mxu0 0
      %661 = vmatprep.subr.bf16.mxu0 0
      %662 = vmatpush1.bf16.msra.mxu0 0
      %663 = vmatprep.subr.bf16.mxu0 0
      %664 = vmatpush1.bf16.msra.mxu0 0
      %665 = vmatprep.subr.bf16.mxu0 0
      %666 = vmatpush1.bf16.msra.mxu0 0
      %667 = vmatprep.subr.bf16.mxu0 0
      %668 = vmatpush1.bf16.msra.mxu0 0
      %669 = vmatprep.mubr.bf16.mxu0 0
      %670 = vmatmul.mubr.bf16.gmra.mrb[0].mxu0 %v635
      %v671 = vpop.f32.mrb[0].mxu0
      %v672 = vadd.f32 0.0, %v671
      %v673 = vpop.f32.mrb[0].mxu0
      %v674 = vpop.f32.mrb[0].mxu0
      %v675 = vpop.f32.mrb[0].mxu0
      %676 = vdwg.mxu0
      %v679 = vunpack.c.l.b16 %v528
      %v680 = vunpack.c.l.b16 %v529
      %v681 = vpack.c.b16 %v680, %v679
      %v684 = vsel %vm473, %v521, 0
      %686 = vmatprep.subr.bf16.mxu0 0
      %687 = vmatpush1.bf16.msra.mxu0 %v681
      %688 = vmatprep.subr.bf16.mxu0 0
      %689 = vmatpush1.bf16.msra.mxu0 0
      %690 = vmatprep.subr.bf16.mxu0 0
      %691 = vmatpush1.bf16.msra.mxu0 0
      %692 = vmatprep.subr.bf16.mxu0 0
      %693 = vmatpush1.bf16.msra.mxu0 0
      %694 = vmatprep.subr.bf16.mxu0 0
      %695 = vmatpush1.bf16.msra.mxu0 0
      %696 = vmatprep.subr.bf16.mxu0 0
      %697 = vmatpush1.bf16.msra.mxu0 0
      %698 = vmatprep.subr.bf16.mxu0 0
      %699 = vmatpush1.bf16.msra.mxu0 0
      %700 = vmatprep.subr.bf16.mxu0 0
      %701 = vmatpush1.bf16.msra.mxu0 0
      %702 = vmatprep.subr.bf16.mxu0 0
      %703 = vmatpush1.bf16.msra.mxu0 0
      %704 = vmatprep.subr.bf16.mxu0 0
      %705 = vmatpush1.bf16.msra.mxu0 0
      %706 = vmatprep.subr.bf16.mxu0 0
      %707 = vmatpush1.bf16.msra.mxu0 0
      %708 = vmatprep.subr.bf16.mxu0 0
      %709 = vmatpush1.bf16.msra.mxu0 0
      %710 = vmatprep.subr.bf16.mxu0 0
      %711 = vmatpush1.bf16.msra.mxu0 0
      %712 = vmatprep.subr.bf16.mxu0 0
      %713 = vmatpush1.bf16.msra.mxu0 0
      %714 = vmatprep.subr.bf16.mxu0 0
      %715 = vmatpush1.bf16.msra.mxu0 0
      %716 = vmatprep.subr.bf16.mxu0 0
      %717 = vmatpush1.bf16.msra.mxu0 0
      %718 = vmatprep.mubr.bf16.mxu0 0
      %719 = vmatmul.mubr.bf16.gmra.mrb[0].mxu0 %v684
      %v720 = vpop.f32.mrb[0].mxu0
      %v721 = vadd.f32 0.0, %v720
      %v722 = vpop.f32.mrb[0].mxu0
      %v723 = vpop.f32.mrb[0].mxu0
      %v724 = vpop.f32.mrb[0].mxu0
      %725 = vdwg.mxu0
      %v726 = vpack.c.bf16 %v574, %v574
      %v727 = vpack.c.bf16 %v623, %v623
      %v728 = vpack.c.bf16 %v672, %v672
      %v729 = vpack.c.bf16 %v721, %v721
      %vm730 = vcmask 60416
      %731 = vst.msk [vmem:[%s253] sm:$0xf] %vm730, %v726
      %732 = vst.msk [vmem:[%s253 + $0x4] sm:$0xf] %vm730, %v727
      %733 = vst.msk [vmem:[%s253 + $0x8] sm:$0xf] %vm730, %v728
      %734 = vst.msk [vmem:[%s253 + $0xc] sm:$0xf] %vm730, %v729
      %s735 = smul.u32 4, %s18
      %p736 = scmp.lt.s32.totalorder %s735, 7
      %s737 = scalar_select %p736, %s735, 7
      %p738 = scmp.lt.s32.totalorder %s19, 0
      %s739 = scalar_select %p738, %s19, 0
      %s740 = sadd.s32 %s739, %s737
      %s741 = smul.addr %s740, 4
      %s742 = scalar_lea.vmem %s3, %s741
      // Predicated region
      $region33: #{mpu_forward.8} parent=31 // pred_check
        %p743 = pneg %p126
      $region34: #{mpu_forward.8} parent=31 // pred_check_branch
        %745 = sbr.rel (%p743) target = $region36
      $region35: #{mpu_forward.8} parent=31 // pred_region
        %s746 = smul.u32 4, %s18
      $region36: #{mpu_forward.8} parent=31 // pred_fallthru
        _
    $region32: #{mpu_forward.8} parent=5 // pred_fallthru
      _
    %p747 = scmp.le.s32.totalorder 2, %s9
    // Predicated region
    $region37: #{mpu_forward.8} parent=5 // pred_check
      %p748 = pneg %p747
    $region38: #{mpu_forward.8} parent=5 // pred_check_branch
      %750 = sbr.rel (%p748) target = $region40
    $region39: #{mpu_forward.8} parent=5 // pred_region
      %s751 = ssub.s32 %s9, 2
      // Predicated region
      $region41: #{mpu_forward.8} parent=39 // pred_check
        %p752 = pneg %p132
      $region42: #{mpu_forward.8} parent=39 // pred_check_branch
        %754 = sbr.rel (%p752) target = $region44
      $region43: #{mpu_forward.8} parent=39 // pred_region
        %s755 = smul.u32 4, %s20
        %p756 = scmp.lt.s32.totalorder %s755, 7
        %s757 = scalar_select %p756, %s755, 7
        %p758 = scmp.lt.s32.totalorder %s21, 0
        %s759 = scalar_select %p758, %s21, 0
        %s760 = sadd.s32 %s759, %s757
        %s761 = smul.addr %s760, 4
        %s762 = scalar_lea.vmem %s3, %s761
      $region44: #{mpu_forward.8} parent=39 // pred_fallthru
        _
    $region40: #{mpu_forward.8} parent=5 // pred_fallthru
      _
  $region6: #{mpu_forward.8} parent=0 // loop_footer
    %s13 = sadd.s32 1, %s9
  $region7: #{mpu_forward.8} parent=0 // loop_footer_branch
    %8 = sbr.rel target = $region3
  $region8: #{mpu_forward.8} parent=0 // loop_exit
    _

// kernel: mpu_forward.10
$region0: #{mpu_forward.10}
  #allocation0 [shape = 'u32[]', space=smem, size = 0x4, offset = 0x4, fixed_abs, tag = 'smem constant byte address 0x4 - core index']
  #allocation1 [shape = 'u32[144,128]{1,0:T(1,128)}', space=vmem, size = 0x12000, scoped, tag = 'internal scratch']
  %s0 = inlined_call_operand.vmem [shape: bf16[8,8,8], index: 0, kind: input, shape index: {}]
  %s1 = inlined_call_operand.vmem [shape: bf16[8,8,8], index: 1, kind: input, shape index: {}]
  %s2 = inlined_call_operand.vmem [shape: bf16[8,8,8], index: 2, kind: input, shape index: {}]
  %s3 = inlined_call_operand.vmem [shape: bf16[8,8,8], index: 3, kind: output, shape index: {}]
  %s4 = sld [smem:[#allocation0]]
  $region45: #{mpu_forward.10} parent=0
    _
  %s6 = ssub.s32 1, %s4
  %s7 = scalar_select 0, %s6, %s4
  loop: start=0, step=1, limit=4
  $region2: #{mpu_forward.10} parent=0 // loop_pre_header
    _
  $region3: #{mpu_forward.10} parent=0 // loop_header
    %s9 = sphi 0, %s13
    %p10 = scmp.ge.s32.totalorder %s9, 4
    %s16 = sphi 0, %s28
    %s17 = sphi 0, %s24
    %s18 = sphi 0, %s16
    %s19 = sphi 0, %s17
    %s20 = sphi 0, %s18
    %s21 = sphi 0, %s19
    %s33 = sphi 0, %s35
    %s36 = sphi 0, %s33
    %s37 = sphi 0, %s36
    %s53 = sphi 0, %s37
    %s59 = sphi 0, %s61
    %s62 = sphi 0, %s59
    %s63 = sphi 0, %s62
    %s79 = sphi 0, %s63
    %s85 = sphi 0, %s87
    %s88 = sphi 0, %s85
    %s89 = sphi 0, %s88
    %s105 = sphi 0, %s89
    %s113 = sphi 0, %s115
    %s116 = sphi 0, %s113
    %s117 = sphi 0, %s116
    %s133 = sphi 0, %s117
  $region4: #{mpu_forward.10} parent=0 // loop_header_branch
    %12 = sbr.rel (%p10) target = $region8
  $region5: #{mpu_forward.10} parent=0 // loop_body
    %s14 = ssub.s32 %s9, 1
    %s15 = ssub.s32 %s9, 2
    %s22 = sadd.s32 1, %s17
    %p23 = scmp.ge.s32.totalorder %s22, 1
    %s24 = scalar_select %p23, 0, %s22
    %s25 = sadd.s32 1, %s16
    %s26 = scalar_select %p23, %s25, %s16
    %p27 = scmp.ge.s32.totalorder %s26, 2
    %s28 = scalar_select %p27, 0, %s26
    %s29 = ssub.s32 %s16, %s28
    %s30 = ssub.s32 %s17, %s24
    %s31 = sor.u32 %s29, %s30
    %p32 = scmp.eq.s32.totalorder %s31, 0
    %s34 = sadd.s32 %s33, 1
    %s35 = scalar_select %p32, %s33, %s34
    %p38 = pneg %p32
    %p39 = scmp.eq.s32.totalorder %s9, 1
    %p40 = por %p38, %p39
    %p41 = scmp.ne.s32.totalorder %s33, %s36
    %p42 = scmp.eq.s32.totalorder %s9, 0
    %p43 = por %p41, %p42
    %p44 = scmp.ne.s32.totalorder %s33, %s36
    %p45 = scmp.eq.s32.totalorder %s14, 1
    %p46 = por %p44, %p45
    %p47 = scmp.ne.s32.totalorder %s36, %s37
    %p48 = scmp.eq.s32.totalorder %s14, 0
    %p49 = por %p47, %p48
    %p50 = scmp.ne.s32.totalorder %s36, %s37
    %p51 = scmp.eq.s32.totalorder %s15, 1
    %p52 = por %p50, %p51
    %p54 = scmp.ne.s32.totalorder %s37, %s53
    %p55 = scmp.eq.s32.totalorder %s15, 0
    %p56 = por %p54, %p55
    %s57 = ssub.s32 %s16, %s28
    %p58 = scmp.eq.s32.totalorder %s57, 0
    %s60 = sadd.s32 %s59, 1
    %s61 = scalar_select %p58, %s59, %s60
    %p64 = pneg %p58
    %p65 = scmp.eq.s32.totalorder %s9, 1
    %p66 = por %p64, %p65
    %p67 = scmp.ne.s32.totalorder %s59, %s62
    %p68 = scmp.eq.s32.totalorder %s9, 0
    %p69 = por %p67, %p68
    %p70 = scmp.ne.s32.totalorder %s59, %s62
    %p71 = scmp.eq.s32.totalorder %s14, 1
    %p72 = por %p70, %p71
    %p73 = scmp.ne.s32.totalorder %s62, %s63
    %p74 = scmp.eq.s32.totalorder %s14, 0
    %p75 = por %p73, %p74
    %p76 = scmp.ne.s32.totalorder %s62, %s63
    %p77 = scmp.eq.s32.totalorder %s15, 1
    %p78 = por %p76, %p77
    %p80 = scmp.ne.s32.totalorder %s63, %s79
    %p81 = scmp.eq.s32.totalorder %s15, 0
    %p82 = por %p80, %p81
    %s83 = ssub.s32 %s16, %s28
    %p84 = scmp.eq.s32.totalorder %s83, 0
    %s86 = sadd.s32 %s85, 1
    %s87 = scalar_select %p84, %s85, %s86
    %p90 = pneg %p84
    %p91 = scmp.eq.s32.totalorder %s9, 1
    %p92 = por %p90, %p91
    %p93 = scmp.ne.s32.totalorder %s85, %s88
    %p94 = scmp.eq.s32.totalorder %s9, 0
    %p95 = por %p93, %p94
    %p96 = scmp.ne.s32.totalorder %s85, %s88
    %p97 = scmp.eq.s32.totalorder %s14, 1
    %p98 = por %p96, %p97
    %p99 = scmp.ne.s32.totalorder %s88, %s89
    %p100 = scmp.eq.s32.totalorder %s14, 0
    %p101 = por %p99, %p100
    %p102 = scmp.ne.s32.totalorder %s88, %s89
    %p103 = scmp.eq.s32.totalorder %s15, 1
    %p104 = por %p102, %p103
    %p106 = scmp.ne.s32.totalorder %s89, %s105
    %p107 = scmp.eq.s32.totalorder %s15, 0
    %p108 = por %p106, %p107
    %s109 = ssub.s32 %s16, %s28
    %s110 = ssub.s32 %s17, %s24
    %s111 = sor.u32 %s109, %s110
    %p112 = scmp.eq.s32.totalorder %s111, 0
    %s114 = sadd.s32 %s113, 1
    %s115 = scalar_select %p112, %s113, %s114
    %p118 = pneg %p112
    %p119 = scmp.eq.s32.totalorder %s9, 1
    %p120 = por %p118, %p119
    %p121 = scmp.ne.s32.totalorder %s113, %s116
    %p122 = scmp.eq.s32.totalorder %s9, 0
    %p123 = por %p121, %p122
    %p124 = scmp.ne.s32.totalorder %s113, %s116
    %p125 = scmp.eq.s32.totalorder %s14, 1
    %p126 = por %p124, %p125
    %p127 = scmp.ne.s32.totalorder %s116, %s117
    %p128 = scmp.eq.s32.totalorder %s14, 0
    %p129 = por %p127, %p128
    %p130 = scmp.ne.s32.totalorder %s116, %s117
    %p131 = scmp.eq.s32.totalorder %s15, 1
    %p132 = por %p130, %p131
    %p134 = scmp.ne.s32.totalorder %s117, %s133
    %p135 = scmp.eq.s32.totalorder %s15, 0
    %p136 = por %p134, %p135
    %p137 = scmp.le.s32.totalorder 1, %s9
    %p138 = scmp.lt.s32.totalorder %s9, 3
    %p139 = pnand %p137, %p138
    %p140 = pneg %p139
    // Predicated region
    $region9: #{mpu_forward.10} parent=5 // pred_check
      _
    $region10: #{mpu_forward.10} parent=5 // pred_check_branch
      %142 = sbr.rel (%p139) target = $region12
    $region11: #{mpu_forward.10} parent=5 // pred_region
      %s143 = ssub.s32 %s9, 1
    $region12: #{mpu_forward.10} parent=5 // pred_fallthru
      _
    %p144 = scmp.lt.s32.totalorder %s9, 2
    // Predicated region
    $region13: #{mpu_forward.10} parent=5 // pred_check
      %p145 = pneg %p144
    $region14: #{mpu_forward.10} parent=5 // pred_check_branch
      %147 = sbr.rel (%p145) target = $region16
    $region15: #{mpu_forward.10} parent=5 // pred_region
      // Predicated region
      $region17: #{mpu_forward.10} parent=15 // pred_check
        %p148 = pneg %p43
      $region18: #{mpu_forward.10} parent=15 // pred_check_branch
        %150 = sbr.rel (%p148) target = $region20
      $region19: #{mpu_forward.10} parent=15 // pred_region
        %s151 = smul.u32 4, %s16
        %p152 = scmp.lt.s32.totalorder %s151, 7
        %s153 = scalar_select %p152, %s151, 7
        %p154 = scmp.lt.s32.totalorder %s17, 0
        %s155 = scalar_select %p154, %s17, 0
        %s156 = sadd.s32 %s155, %s153
        %s157 = smul.addr %s156, 4
        %s158 = scalar_lea.vmem %s0, %s157
        %s159 = smul.u32 4, %s16
      $region20: #{mpu_forward.10} parent=15 // pred_fallthru
        _
      // Predicated region
      $region21: #{mpu_forward.10} parent=15 // pred_check
        %p160 = pneg %p69
      $region22: #{mpu_forward.10} parent=15 // pred_check_branch
        %162 = sbr.rel (%p160) target = $region24
      $region23: #{mpu_forward.10} parent=15 // pred_region
        %s163 = smul.u32 4, %s16
        %p164 = scmp.lt.s32.totalorder %s163, 7
        %s165 = scalar_select %p164, %s163, 7
        %s166 = smul.addr %s165, 4
        %s167 = scalar_lea.vmem %s1, %s166
        %s168 = smul.u32 4, %s16
      $region24: #{mpu_forward.10} parent=15 // pred_fallthru
        _
      // Predicated region
      $region25: #{mpu_forward.10} parent=15 // pred_check
        %p169 = pneg %p95
      $region26: #{mpu_forward.10} parent=15 // pred_check_branch
        %171 = sbr.rel (%p169) target = $region28
      $region27: #{mpu_forward.10} parent=15 // pred_region
        %s172 = smul.u32 4, %s16
        %p173 = scmp.lt.s32.totalorder %s172, 7
        %s174 = scalar_select %p173, %s172, 7
        %s175 = smul.addr %s174, 4
        %s176 = scalar_lea.vmem %s2, %s175
        %s177 = smul.u32 4, %s16
      $region28: #{mpu_forward.10} parent=15 // pred_fallthru
        _
    $region16: #{mpu_forward.10} parent=5 // pred_fallthru
      _
    %p178 = scmp.le.s32.totalorder 1, %s9
    %p179 = scmp.lt.s32.totalorder %s9, 3
    %p180 = pnand %p178, %p179
    %p181 = pneg %p180
    // Predicated region
    $region29: #{mpu_forward.10} parent=5 // pred_check
      _
    $region30: #{mpu_forward.10} parent=5 // pred_check_branch
      %183 = sbr.rel (%p180) target = $region32
    $region31: #{mpu_forward.10} parent=5 // pred_region
      %s184 = ssub.s32 %s9, 1
      %s185 = smul.u32 4, %s18
      %p186 = scmp.lt.s32.totalorder %s185, 7
      %s187 = scalar_select %p186, %s185, 7
      %p188 = scmp.lt.s32.totalorder %s19, 0
      %s189 = scalar_select %p188, %s19, 0
      %s190 = sadd.s32 %s189, %s187
      %s191 = smul.addr %s190, 4
      %s192 = scalar_lea.vmem %s0, %s191
      %p193 = pneg %p49
      %p194 = pneg %p46
      %s195 = smul.u32 4, %s18
      %p196 = scmp.lt.s32.totalorder %s195, 7
      %s197 = scalar_select %p196, %s195, 7
      %s198 = smul.addr %s197, 4
      %s199 = scalar_lea.vmem %s1, %s198
      %p200 = pneg %p75
      %p201 = pneg %p72
      %s202 = smul.u32 4, %s18
      %p203 = scmp.lt.s32.totalorder %s202, 7
      %s204 = scalar_select %p203, %s202, 7
      %s205 = smul.addr %s204, 4
      %s206 = scalar_lea.vmem %s2, %s205
      %p207 = pneg %p101
      %p208 = pneg %p98
      %p209 = pneg %p129
      %p210 = pneg %p126
      %s211 = smul.u32 4, %s18
      %p212 = scmp.lt.s32.totalorder %s211, 7
      %s213 = scalar_select %p212, %s211, 7
      %p214 = scmp.lt.s32.totalorder %s19, 0
      %s215 = scalar_select %p214, %s19, 0
      %s216 = sadd.s32 %s215, %s213
      %s217 = smul.addr %s216, 4
      %s218 = scalar_lea.vmem %s3, %s217
      %s219 = smul.u32 4, %s18
      %p220 = scmp.lt.s32.totalorder %s219, 7
      %s221 = scalar_select %p220, %s219, 7
      %p222 = scmp.lt.s32.totalorder %s19, 0
      %s223 = scalar_select %p222, %s19, 0
      %s224 = sadd.s32 %s223, %s221
      %s225 = smul.addr %s224, 4
      %s226 = scalar_lea.vmem %s0, %s225
      %s227 = smul.u32 4, %s18
      %s228 = smul.u32 4, %s18
      %p229 = scmp.lt.s32.totalorder %s228, 7
      %s230 = scalar_select %p229, %s228, 7
      %s231 = smul.addr %s230, 4
      %s232 = scalar_lea.vmem %s1, %s231
      %s233 = smul.u32 4, %s18
      %s234 = smul.u32 4, %s18
      %p235 = scmp.lt.s32.totalorder %s234, 7
      %s236 = scalar_select %p235, %s234, 7
      %s237 = smul.addr %s236, 4
      %s238 = scalar_lea.vmem %s2, %s237
      %s239 = smul.u32 4, %s18
      %s240 = smul.u32 4, %s18
      %p241 = scmp.lt.s32.totalorder %s240, 7
      %s242 = scalar_select %p241, %s240, 7
      %p243 = scmp.lt.s32.totalorder %s19, 0
      %s244 = scalar_select %p243, %s19, 0
      %s245 = sadd.s32 %s244, %s242
      %s246 = smul.addr %s245, 4
      %s247 = scalar_lea.vmem %s3, %s246
      %s248 = smul.u32 4, %s18
      %v250 = vld [vmem:[%s226] sm:$0xf]
      %v251 = vld [vmem:[%s226 + $0x4] sm:$0xf]
      %v252 = vld [vmem:[%s226 + $0x8] sm:$0xf]
      %v253 = vld [vmem:[%s226 + $0xc] sm:$0xf]
      %v254 = vld [vmem:[%s232] sm:$0xf]
      %v255 = vld [vmem:[%s232 + $0x4] sm:$0xf]
      %v256 = vld [vmem:[%s232 + $0x8] sm:$0xf]
      %v257 = vld [vmem:[%s232 + $0xc] sm:$0xf]
      %vm258 = vcmask 64512
      %v260 = vsel %vm258, %v250, 0
      %v263 = vsel %vm258, %v254, 0
      %265 = vmatprep.subr.bf16.mxu0 0
      %266 = vmatpush1.bf16.xpose.msra.mxu0 %v263
      %267 = vmatprep.subr.bf16.mxu0 0
      %268 = vmatpush1.bf16.xpose.msra.mxu0 0
      %269 = vmatprep.subr.bf16.mxu0 0
      %270 = vmatpush1.bf16.xpose.msra.mxu0 0
      %271 = vmatprep.subr.bf16.mxu0 0
      %272 = vmatpush1.bf16.xpose.msra.mxu0 0
      %273 = vmatprep.subr.bf16.mxu0 0
      %274 = vmatpush1.bf16.xpose.msra.mxu0 0
      %275 = vmatprep.subr.bf16.mxu0 0
      %276 = vmatpush1.bf16.xpose.msra.mxu0 0
      %277 = vmatprep.subr.bf16.mxu0 0
      %278 = vmatpush1.bf16.xpose.msra.mxu0 0
      %279 = vmatprep.subr.bf16.mxu0 0
      %280 = vmatpush1.bf16.xpose.msra.mxu0 0
      %281 = vmatprep.subr.bf16.mxu0 0
      %282 = vmatpush1.bf16.xpose.msra.mxu0 0
      %283 = vmatprep.subr.bf16.mxu0 0
      %284 = vmatpush1.bf16.xpose.msra.mxu0 0
      %285 = vmatprep.subr.bf16.mxu0 0
      %286 = vmatpush1.bf16.xpose.msra.mxu0 0
      %287 = vmatprep.subr.bf16.mxu0 0
      %288 = vmatpush1.bf16.xpose.msra.mxu0 0
      %289 = vmatprep.subr.bf16.mxu0 0
      %290 = vmatpush1.bf16.xpose.msra.mxu0 0
      %291 = vmatprep.subr.bf16.mxu0 0
      %292 = vmatpush1.bf16.xpose.msra.mxu0 0
      %293 = vmatprep.subr.bf16.mxu0 0
      %294 = vmatpush1.bf16.xpose.msra.mxu0 0
      %295 = vmatprep.subr.bf16.mxu0 0
      %296 = vmatpush1.bf16.xpose.msra.mxu0 0
      %297 = vmatprep.mubr.bf16.mxu0 0
      %298 = vmatmul.mubr.bf16.gmra.mrb[0].mxu0 %v260
      %v299 = vpop.f32.mrb[0].mxu0
      %v300 = vadd.f32 0.0, %v299
      %v301 = vpop.f32.mrb[0].mxu0
      %v302 = vpop.f32.mrb[0].mxu0
      %v303 = vpop.f32.mrb[0].mxu0
      %304 = vdwg.mxu0
      %v306 = vsel %vm258, %v251, 0
      %v309 = vsel %vm258, %v255, 0
      %311 = vmatprep.subr.bf16.mxu0 0
      %312 = vmatpush1.bf16.xpose.msra.mxu0 %v309
      %313 = vmatprep.subr.bf16.mxu0 0
      %314 = vmatpush1.bf16.xpose.msra.mxu0 0
      %315 = vmatprep.subr.bf16.mxu0 0
      %316 = vmatpush1.bf16.xpose.msra.mxu0 0
      %317 = vmatprep.subr.bf16.mxu0 0
      %318 = vmatpush1.bf16.xpose.msra.mxu0 0
      %319 = vmatprep.subr.bf16.mxu0 0
      %320 = vmatpush1.bf16.xpose.msra.mxu0 0
      %321 = vmatprep.subr.bf16.mxu0 0
      %322 = vmatpush1.bf16.xpose.msra.mxu0 0
      %323 = vmatprep.subr.bf16.mxu0 0
      %324 = vmatpush1.bf16.xpose.msra.mxu0 0
      %325 = vmatprep.subr.bf16.mxu0 0
      %326 = vmatpush1.bf16.xpose.msra.mxu0 0
      %327 = vmatprep.subr.bf16.mxu0 0
      %328 = vmatpush1.bf16.xpose.msra.mxu0 0
      %329 = vmatprep.subr.bf16.mxu0 0
      %330 = vmatpush1.bf16.xpose.msra.mxu0 0
      %331 = vmatprep.subr.bf16.mxu0 0
      %332 = vmatpush1.bf16.xpose.msra.mxu0 0
      %333 = vmatprep.subr.bf16.mxu0 0
      %334 = vmatpush1.bf16.xpose.msra.mxu0 0
      %335 = vmatprep.subr.bf16.mxu0 0
      %336 = vmatpush1.bf16.xpose.msra.mxu0 0
      %337 = vmatprep.subr.bf16.mxu0 0
      %338 = vmatpush1.bf16.xpose.msra.mxu0 0
      %339 = vmatprep.subr.bf16.mxu0 0
      %340 = vmatpush1.bf16.xpose.msra.mxu0 0
      %341 = vmatprep.subr.bf16.mxu0 0
      %342 = vmatpush1.bf16.xpose.msra.mxu0 0
      %343 = vmatprep.mubr.bf16.mxu0 0
      %344 = vmatmul.mubr.bf16.gmra.mrb[0].mxu0 %v306
      %v345 = vpop.f32.mrb[0].mxu0
      %v346 = vadd.f32 0.0, %v345
      %v347 = vpop.f32.mrb[0].mxu0
      %v348 = vpop.f32.mrb[0].mxu0
      %v349 = vpop.f32.mrb[0].mxu0
      %350 = vdwg.mxu0
      %v352 = vsel %vm258, %v252, 0
      %v355 = vsel %vm258, %v256, 0
      %357 = vmatprep.subr.bf16.mxu0 0
      %358 = vmatpush1.bf16.xpose.msra.mxu0 %v355
      %359 = vmatprep.subr.bf16.mxu0 0
      %360 = vmatpush1.bf16.xpose.msra.mxu0 0
      %361 = vmatprep.subr.bf16.mxu0 0
      %362 = vmatpush1.bf16.xpose.msra.mxu0 0
      %363 = vmatprep.subr.bf16.mxu0 0
      %364 = vmatpush1.bf16.xpose.msra.mxu0 0
      %365 = vmatprep.subr.bf16.mxu0 0
      %366 = vmatpush1.bf16.xpose.msra.mxu0 0
      %367 = vmatprep.subr.bf16.mxu0 0
      %368 = vmatpush1.bf16.xpose.msra.mxu0 0
      %369 = vmatprep.subr.bf16.mxu0 0
      %370 = vmatpush1.bf16.xpose.msra.mxu0 0
      %371 = vmatprep.subr.bf16.mxu0 0
      %372 = vmatpush1.bf16.xpose.msra.mxu0 0
      %373 = vmatprep.subr.bf16.mxu0 0
      %374 = vmatpush1.bf16.xpose.msra.mxu0 0
      %375 = vmatprep.subr.bf16.mxu0 0
      %376 = vmatpush1.bf16.xpose.msra.mxu0 0
      %377 = vmatprep.subr.bf16.mxu0 0
      %378 = vmatpush1.bf16.xpose.msra.mxu0 0
      %379 = vmatprep.subr.bf16.mxu0 0
      %380 = vmatpush1.bf16.xpose.msra.mxu0 0
      %381 = vmatprep.subr.bf16.mxu0 0
      %382 = vmatpush1.bf16.xpose.msra.mxu0 0
      %383 = vmatprep.subr.bf16.mxu0 0
      %384 = vmatpush1.bf16.xpose.msra.mxu0 0
      %385 = vmatprep.subr.bf16.mxu0 0
      %386 = vmatpush1.bf16.xpose.msra.mxu0 0
      %387 = vmatprep.subr.bf16.mxu0 0
      %388 = vmatpush1.bf16.xpose.msra.mxu0 0
      %389 = vmatprep.mubr.bf16.mxu0 0
      %390 = vmatmul.mubr.bf16.gmra.mrb[0].mxu0 %v352
      %v391 = vpop.f32.mrb[0].mxu0
      %v392 = vadd.f32 0.0, %v391
      %v393 = vpop.f32.mrb[0].mxu0
      %v394 = vpop.f32.mrb[0].mxu0
      %v395 = vpop.f32.mrb[0].mxu0
      %396 = vdwg.mxu0
      %v398 = vsel %vm258, %v253, 0
      %v401 = vsel %vm258, %v257, 0
      %403 = vmatprep.subr.bf16.mxu0 0
      %404 = vmatpush1.bf16.xpose.msra.mxu0 %v401
      %405 = vmatprep.subr.bf16.mxu0 0
      %406 = vmatpush1.bf16.xpose.msra.mxu0 0
      %407 = vmatprep.subr.bf16.mxu0 0
      %408 = vmatpush1.bf16.xpose.msra.mxu0 0
      %409 = vmatprep.subr.bf16.mxu0 0
      %410 = vmatpush1.bf16.xpose.msra.mxu0 0
      %411 = vmatprep.subr.bf16.mxu0 0
      %412 = vmatpush1.bf16.xpose.msra.mxu0 0
      %413 = vmatprep.subr.bf16.mxu0 0
      %414 = vmatpush1.bf16.xpose.msra.mxu0 0
      %415 = vmatprep.subr.bf16.mxu0 0
      %416 = vmatpush1.bf16.xpose.msra.mxu0 0
      %417 = vmatprep.subr.bf16.mxu0 0
      %418 = vmatpush1.bf16.xpose.msra.mxu0 0
      %419 = vmatprep.subr.bf16.mxu0 0
      %420 = vmatpush1.bf16.xpose.msra.mxu0 0
      %421 = vmatprep.subr.bf16.mxu0 0
      %422 = vmatpush1.bf16.xpose.msra.mxu0 0
      %423 = vmatprep.subr.bf16.mxu0 0
      %424 = vmatpush1.bf16.xpose.msra.mxu0 0
      %425 = vmatprep.subr.bf16.mxu0 0
      %426 = vmatpush1.bf16.xpose.msra.mxu0 0
      %427 = vmatprep.subr.bf16.mxu0 0
      %428 = vmatpush1.bf16.xpose.msra.mxu0 0
      %429 = vmatprep.subr.bf16.mxu0 0
      %430 = vmatpush1.bf16.xpose.msra.mxu0 0
      %431 = vmatprep.subr.bf16.mxu0 0
      %432 = vmatpush1.bf16.xpose.msra.mxu0 0
      %433 = vmatprep.subr.bf16.mxu0 0
      %434 = vmatpush1.bf16.xpose.msra.mxu0 0
      %435 = vmatprep.mubr.bf16.mxu0 0
      %436 = vmatmul.mubr.bf16.gmra.mrb[0].mxu0 %v398
      %v437 = vpop.f32.mrb[0].mxu0
      %v438 = vadd.f32 0.0, %v437
      %v439 = vpop.f32.mrb[0].mxu0
      %v440 = vpop.f32.mrb[0].mxu0
      %v441 = vpop.f32.mrb[0].mxu0
      %442 = vdwg.mxu0
      %v443 = vsel %vm258, %v300, -inf
      %444 = vmax.xlane.f32.xlu0 %v443
      %v445 = vpop.xlane.xlu0 %444
      %v446 = vsel %vm258, %v346, -inf
      %447 = vmax.xlane.f32.xlu0 %v446
      %v448 = vpop.xlane.xlu0 %447
      %v449 = vsel %vm258, %v392, -inf
      %450 = vmax.xlane.f32.xlu0 %v449
      %v451 = vpop.xlane.xlu0 %450
      %v452 = vsel %vm258, %v438, -inf
      %453 = vmax.xlane.f32.xlu0 %v452
      %v454 = vpop.xlane.xlu0 %453
      %v455 = vsub.f32 %v300, %v445
      %v456 = vsub.f32 %v346, %v448
      %v457 = vsub.f32 %v392, %v451
      %v458 = vsub.f32 %v438, %v454
      %v459 = vmul.f32 %v455, 1.442695
      %v460 = vpow.pop %v459
      %v461 = vmul.f32 %v456, 1.442695
      %v462 = vpow.pop %v461
      %v463 = vmul.f32 %v457, 1.442695
      %v464 = vpow.pop %v463
      %v465 = vmul.f32 %v458, 1.442695
      %v466 = vpow.pop %v465
      %v467 = vsel %vm258, %v460, 0.0
      %468 = vadd.xlane.f32.xlu0 %v467
      %v469 = vpop.xlane.xlu0 %468
      %v470 = vsel %vm258, %v462, 0.0
      %471 = vadd.xlane.f32.xlu0 %v470
      %v472 = vpop.xlane.xlu0 %471
      %v473 = vsel %vm258, %v464, 0.0
      %474 = vadd.xlane.f32.xlu0 %v473
      %v475 = vpop.xlane.xlu0 %474
      %v476 = vsel %vm258, %v466, 0.0
      %477 = vadd.xlane.f32.xlu0 %v476
      %v478 = vpop.xlane.xlu0 %477
      %v479 = vrcp.pop %v469
      %v480 = vrcp.pop %v472
      %v481 = vrcp.pop %v475
      %v482 = vrcp.pop %v478
      %v483 = vmul.f32 %v460, %v479
      %v484 = vmul.f32 %v462, %v480
      %v485 = vmul.f32 %v464, %v481
      %v486 = vmul.f32 %v466, %v482
      %v487 = vpack.c.bf16 %v483, %v483
      %v488 = vpack.c.bf16 %v484, %v484
      %v489 = vpack.c.bf16 %v485, %v485
      %v490 = vpack.c.bf16 %v486, %v486
      %v491 = vld [vmem:[%s238] sm:$0xf]
      %v492 = vld [vmem:[%s238 + $0x4] sm:$0xf]
      %v493 = vld [vmem:[%s238 + $0x8] sm:$0xf]
      %v494 = vld [vmem:[%s238 + $0xc] sm:$0xf]
      %v496 = vsel %vm258, %v487, 0
      %vm498 = vcmask 1043456
      %v500 = vsel %vm498, %v491, 0
      %502 = vmatprep.subr.bf16.mxu0 0
      %503 = vmatpush1.bf16.msra.mxu0 %v500
      %504 = vmatprep.subr.bf16.mxu0 0
      %505 = vmatpush1.bf16.msra.mxu0 0
      %506 = vmatprep.subr.bf16.mxu0 0
      %507 = vmatpush1.bf16.msra.mxu0 0
      %508 = vmatprep.subr.bf16.mxu0 0
      %509 = vmatpush1.bf16.msra.mxu0 0
      %510 = vmatprep.subr.bf16.mxu0 0
      %511 = vmatpush1.bf16.msra.mxu0 0
      %512 = vmatprep.subr.bf16.mxu0 0
      %513 = vmatpush1.bf16.msra.mxu0 0
      %514 = vmatprep.subr.bf16.mxu0 0
      %515 = vmatpush1.bf16.msra.mxu0 0
      %516 = vmatprep.subr.bf16.mxu0 0
      %517 = vmatpush1.bf16.msra.mxu0 0
      %518 = vmatprep.subr.bf16.mxu0 0
      %519 = vmatpush1.bf16.msra.mxu0 0
      %520 = vmatprep.subr.bf16.mxu0 0
      %521 = vmatpush1.bf16.msra.mxu0 0
      %522 = vmatprep.subr.bf16.mxu0 0
      %523 = vmatpush1.bf16.msra.mxu0 0
      %524 = vmatprep.subr.bf16.mxu0 0
      %525 = vmatpush1.bf16.msra.mxu0 0
      %526 = vmatprep.subr.bf16.mxu0 0
      %527 = vmatpush1.bf16.msra.mxu0 0
      %528 = vmatprep.subr.bf16.mxu0 0
      %529 = vmatpush1.bf16.msra.mxu0 0
      %530 = vmatprep.subr.bf16.mxu0 0
      %531 = vmatpush1.bf16.msra.mxu0 0
      %532 = vmatprep.subr.bf16.mxu0 0
      %533 = vmatpush1.bf16.msra.mxu0 0
      %534 = vmatprep.mubr.bf16.mxu0 0
      %535 = vmatmul.mubr.bf16.gmra.mrb[0].mxu0 %v496
      %v536 = vpop.f32.mrb[0].mxu0
      %v537 = vadd.f32 0.0, %v536
      %v538 = vpop.f32.mrb[0].mxu0
      %v539 = vpop.f32.mrb[0].mxu0
      %v540 = vpop.f32.mrb[0].mxu0
      %541 = vdwg.mxu0
      %v543 = vsel %vm258, %v488, 0
      %v546 = vsel %vm498, %v492, 0
      %548 = vmatprep.subr.bf16.mxu0 0
      %549 = vmatpush1.bf16.msra.mxu0 %v546
      %550 = vmatprep.subr.bf16.mxu0 0
      %551 = vmatpush1.bf16.msra.mxu0 0
      %552 = vmatprep.subr.bf16.mxu0 0
      %553 = vmatpush1.bf16.msra.mxu0 0
      %554 = vmatprep.subr.bf16.mxu0 0
      %555 = vmatpush1.bf16.msra.mxu0 0
      %556 = vmatprep.subr.bf16.mxu0 0
      %557 = vmatpush1.bf16.msra.mxu0 0
      %558 = vmatprep.subr.bf16.mxu0 0
      %559 = vmatpush1.bf16.msra.mxu0 0
      %560 = vmatprep.subr.bf16.mxu0 0
      %561 = vmatpush1.bf16.msra.mxu0 0
      %562 = vmatprep.subr.bf16.mxu0 0
      %563 = vmatpush1.bf16.msra.mxu0 0
      %564 = vmatprep.subr.bf16.mxu0 0
      %565 = vmatpush1.bf16.msra.mxu0 0
      %566 = vmatprep.subr.bf16.mxu0 0
      %567 = vmatpush1.bf16.msra.mxu0 0
      %568 = vmatprep.subr.bf16.mxu0 0
      %569 = vmatpush1.bf16.msra.mxu0 0
      %570 = vmatprep.subr.bf16.mxu0 0
      %571 = vmatpush1.bf16.msra.mxu0 0
      %572 = vmatprep.subr.bf16.mxu0 0
      %573 = vmatpush1.bf16.msra.mxu0 0
      %574 = vmatprep.subr.bf16.mxu0 0
      %575 = vmatpush1.bf16.msra.mxu0 0
      %576 = vmatprep.subr.bf16.mxu0 0
      %577 = vmatpush1.bf16.msra.mxu0 0
      %578 = vmatprep.subr.bf16.mxu0 0
      %579 = vmatpush1.bf16.msra.mxu0 0
      %580 = vmatprep.mubr.bf16.mxu0 0
      %581 = vmatmul.mubr.bf16.gmra.mrb[0].mxu0 %v543
      %v582 = vpop.f32.mrb[0].mxu0
      %v583 = vadd.f32 0.0, %v582
      %v584 = vpop.f32.mrb[0].mxu0
      %v585 = vpop.f32.mrb[0].mxu0
      %v586 = vpop.f32.mrb[0].mxu0
      %587 = vdwg.mxu0
      %v589 = vsel %vm258, %v489, 0
      %v592 = vsel %vm498, %v493, 0
      %594 = vmatprep.subr.bf16.mxu0 0
      %595 = vmatpush1.bf16.msra.mxu0 %v592
      %596 = vmatprep.subr.bf16.mxu0 0
      %597 = vmatpush1.bf16.msra.mxu0 0
      %598 = vmatprep.subr.bf16.mxu0 0
      %599 = vmatpush1.bf16.msra.mxu0 0
      %600 = vmatprep.subr.bf16.mxu0 0
      %601 = vmatpush1.bf16.msra.mxu0 0
      %602 = vmatprep.subr.bf16.mxu0 0
      %603 = vmatpush1.bf16.msra.mxu0 0
      %604 = vmatprep.subr.bf16.mxu0 0
      %605 = vmatpush1.bf16.msra.mxu0 0
      %606 = vmatprep.subr.bf16.mxu0 0
      %607 = vmatpush1.bf16.msra.mxu0 0
      %608 = vmatprep.subr.bf16.mxu0 0
      %609 = vmatpush1.bf16.msra.mxu0 0
      %610 = vmatprep.subr.bf16.mxu0 0
      %611 = vmatpush1.bf16.msra.mxu0 0
      %612 = vmatprep.subr.bf16.mxu0 0
      %613 = vmatpush1.bf16.msra.mxu0 0
      %614 = vmatprep.subr.bf16.mxu0 0
      %615 = vmatpush1.bf16.msra.mxu0 0
      %616 = vmatprep.subr.bf16.mxu0 0
      %617 = vmatpush1.bf16.msra.mxu0 0
      %618 = vmatprep.subr.bf16.mxu0 0
      %619 = vmatpush1.bf16.msra.mxu0 0
      %620 = vmatprep.subr.bf16.mxu0 0
      %621 = vmatpush1.bf16.msra.mxu0 0
      %622 = vmatprep.subr.bf16.mxu0 0
      %623 = vmatpush1.bf16.msra.mxu0 0
      %624 = vmatprep.subr.bf16.mxu0 0
      %625 = vmatpush1.bf16.msra.mxu0 0
      %626 = vmatprep.mubr.bf16.mxu0 0
      %627 = vmatmul.mubr.bf16.gmra.mrb[0].mxu0 %v589
      %v628 = vpop.f32.mrb[0].mxu0
      %v629 = vadd.f32 0.0, %v628
      %v630 = vpop.f32.mrb[0].mxu0
      %v631 = vpop.f32.mrb[0].mxu0
      %v632 = vpop.f32.mrb[0].mxu0
      %633 = vdwg.mxu0
      %v635 = vsel %vm258, %v490, 0
      %v638 = vsel %vm498, %v494, 0
      %640 = vmatprep.subr.bf16.mxu0 0
      %641 = vmatpush1.bf16.msra.mxu0 %v638
      %642 = vmatprep.subr.bf16.mxu0 0
      %643 = vmatpush1.bf16.msra.mxu0 0
      %644 = vmatprep.subr.bf16.mxu0 0
      %645 = vmatpush1.bf16.msra.mxu0 0
      %646 = vmatprep.subr.bf16.mxu0 0
      %647 = vmatpush1.bf16.msra.mxu0 0
      %648 = vmatprep.subr.bf16.mxu0 0
      %649 = vmatpush1.bf16.msra.mxu0 0
      %650 = vmatprep.subr.bf16.mxu0 0
      %651 = vmatpush1.bf16.msra.mxu0 0
      %652 = vmatprep.subr.bf16.mxu0 0
      %653 = vmatpush1.bf16.msra.mxu0 0
      %654 = vmatprep.subr.bf16.mxu0 0
      %655 = vmatpush1.bf16.msra.mxu0 0
      %656 = vmatprep.subr.bf16.mxu0 0
      %657 = vmatpush1.bf16.msra.mxu0 0
      %658 = vmatprep.subr.bf16.mxu0 0
      %659 = vmatpush1.bf16.msra.mxu0 0
      %660 = vmatprep.subr.bf16.mxu0 0
      %661 = vmatpush1.bf16.msra.mxu0 0
      %662 = vmatprep.subr.bf16.mxu0 0
      %663 = vmatpush1.bf16.msra.mxu0 0
      %664 = vmatprep.subr.bf16.mxu0 0
      %665 = vmatpush1.bf16.msra.mxu0 0
      %666 = vmatprep.subr.bf16.mxu0 0
      %667 = vmatpush1.bf16.msra.mxu0 0
      %668 = vmatprep.subr.bf16.mxu0 0
      %669 = vmatpush1.bf16.msra.mxu0 0
      %670 = vmatprep.subr.bf16.mxu0 0
      %671 = vmatpush1.bf16.msra.mxu0 0
      %672 = vmatprep.mubr.bf16.mxu0 0
      %673 = vmatmul.mubr.bf16.gmra.mrb[0].mxu0 %v635
      %v674 = vpop.f32.mrb[0].mxu0
      %v675 = vadd.f32 0.0, %v674
      %v676 = vpop.f32.mrb[0].mxu0
      %v677 = vpop.f32.mrb[0].mxu0
      %v678 = vpop.f32.mrb[0].mxu0
      %679 = vdwg.mxu0
      %v680 = vpack.c.bf16 %v537, %v537
      %v681 = vpack.c.bf16 %v583, %v583
      %v682 = vpack.c.bf16 %v629, %v629
      %v683 = vpack.c.bf16 %v675, %v675
      %vm684 = vcmask 60416
      %685 = vst.msk [vmem:[%s247] sm:$0xf] %vm684, %v680
      %686 = vst.msk [vmem:[%s247 + $0x4] sm:$0xf] %vm684, %v681
      %687 = vst.msk [vmem:[%s247 + $0x8] sm:$0xf] %vm684, %v682
      %688 = vst.msk [vmem:[%s247 + $0xc] sm:$0xf] %vm684, %v683
      %s689 = smul.u32 4, %s18
      %p690 = scmp.lt.s32.totalorder %s689, 7
      %s691 = scalar_select %p690, %s689, 7
      %p692 = scmp.lt.s32.totalorder %s19, 0
      %s693 = scalar_select %p692, %s19, 0
      %s694 = sadd.s32 %s693, %s691
      %s695 = smul.addr %s694, 4
      %s696 = scalar_lea.vmem %s3, %s695
      // Predicated region
      $region33: #{mpu_forward.10} parent=31 // pred_check
        %p697 = pneg %p126
      $region34: #{mpu_forward.10} parent=31 // pred_check_branch
        %699 = sbr.rel (%p697) target = $region36
      $region35: #{mpu_forward.10} parent=31 // pred_region
        %s700 = smul.u32 4, %s18
      $region36: #{mpu_forward.10} parent=31 // pred_fallthru
        _
    $region32: #{mpu_forward.10} parent=5 // pred_fallthru
      _
    %p701 = scmp.le.s32.totalorder 2, %s9
    // Predicated region
    $region37: #{mpu_forward.10} parent=5 // pred_check
      %p702 = pneg %p701
    $region38: #{mpu_forward.10} parent=5 // pred_check_branch
      %704 = sbr.rel (%p702) target = $region40
    $region39: #{mpu_forward.10} parent=5 // pred_region
      %s705 = ssub.s32 %s9, 2
      // Predicated region
      $region41: #{mpu_forward.10} parent=39 // pred_check
        %p706 = pneg %p132
      $region42: #{mpu_forward.10} parent=39 // pred_check_branch
        %708 = sbr.rel (%p706) target = $region44
      $region43: #{mpu_forward.10} parent=39 // pred_region
        %s709 = smul.u32 4, %s20
        %p710 = scmp.lt.s32.totalorder %s709, 7
        %s711 = scalar_select %p710, %s709, 7
        %p712 = scmp.lt.s32.totalorder %s21, 0
        %s713 = scalar_select %p712, %s21, 0
        %s714 = sadd.s32 %s713, %s711
        %s715 = smul.addr %s714, 4
        %s716 = scalar_lea.vmem %s3, %s715
      $region44: #{mpu_forward.10} parent=39 // pred_fallthru
        _
    $region40: #{mpu_forward.10} parent=5 // pred_fallthru
      _
  $region6: #{mpu_forward.10} parent=0 // loop_footer
    %s13 = sadd.s32 1, %s9
  $region7: #{mpu_forward.10} parent=0 // loop_footer_branch
    %8 = sbr.rel target = $region3
  $region8: #{mpu_forward.10} parent=0 // loop_exit
    _

// kernel: mpu_forward.11
$region0: #{mpu_forward.11}
  #allocation0 [shape = 'u32[]', space=smem, size = 0x4, offset = 0x4, fixed_abs, tag = 'smem constant byte address 0x4 - core index']
  #allocation1 [shape = 'u32[144,128]{1,0:T(1,128)}', space=vmem, size = 0x12000, scoped, tag = 'internal scratch']
  %s0 = inlined_call_operand.vmem [shape: bf16[16,32], index: 0, kind: input, shape index: {}]
  %s1 = inlined_call_operand.vmem [shape: f32[32,32], index: 1, kind: input, shape index: {}]
  %s2 = inlined_call_operand.vmem [shape: f32[1,32], index: 2, kind: input, shape index: {}]
  %s3 = inlined_call_operand.vmem [shape: f32[32,128], index: 3, kind: input, shape index: {}]
  %s4 = inlined_call_operand.vmem [shape: f32[1,128], index: 4, kind: input, shape index: {}]
  %s5 = inlined_call_operand.vmem [shape: f32[128,32], index: 5, kind: input, shape index: {}]
  %s6 = inlined_call_operand.vmem [shape: f32[1,32], index: 6, kind: input, shape index: {}]
  %s7 = inlined_call_operand.vmem [shape: f32[1,32], index: 7, kind: input, shape index: {}]
  %s8 = inlined_call_operand.vmem [shape: f32[1,32], index: 8, kind: input, shape index: {}]
  %s9 = inlined_call_operand.vmem [shape: f32[1,32], index: 9, kind: input, shape index: {}]
  %s10 = inlined_call_operand.vmem [shape: f32[1,32], index: 10, kind: input, shape index: {}]
  %s11 = inlined_call_operand.hbm [shape: f32[16,32], index: 11, kind: output, shape index: {}]
  %s12 = sld [smem:[#allocation0]]
  $region54: #{mpu_forward.11} parent=0
    _
  %s14 = ssub.s32 1, %s12
  %s15 = scalar_select 0, %s14, %s12
  $region1: #{mpu_forward.11} parent=0
    #allocation2 [shape = 'u8[8192]{0}', space=vmem, size = 0x2000, scoped, tag = 'output window, operand 0, single buffered']
    #allocation3 [shape = 's32[1]{0}', space=sflag, size = 0x4, scoped, tag = 'scoped memory for mpu_forward.11']
    %16 = vsyncpa [#allocation3], 0
    // Predicated region
    $region2: #{mpu_forward.11} parent=1 // pred_check
      _
    $region3: #{mpu_forward.11} parent=1 // pred_check_branch
      %18 = sbr.rel (0) target = $region5
    $region4: #{mpu_forward.11} parent=1 // pred_region
      _
    $region5: #{mpu_forward.11} parent=1 // pred_fallthru
      _
    // Predicated region
    $region6: #{mpu_forward.11} parent=1 // pred_check
      _
    $region7: #{mpu_forward.11} parent=1 // pred_check_branch
      %20 = sbr.rel (0) target = $region9
    $region8: #{mpu_forward.11} parent=1 // pred_region
      _
    $region9: #{mpu_forward.11} parent=1 // pred_fallthru
      _
    // Predicated region
    $region10: #{mpu_forward.11} parent=1 // pred_check
      _
    $region11: #{mpu_forward.11} parent=1 // pred_check_branch
      %22 = sbr.rel (0) target = $region13
    $region12: #{mpu_forward.11} parent=1 // pred_region
      _
    $region13: #{mpu_forward.11} parent=1 // pred_fallthru
      _
    // Predicated region
    $region14: #{mpu_forward.11} parent=1 // pred_check
      _
    $region15: #{mpu_forward.11} parent=1 // pred_check_branch
      %24 = sbr.rel (0) target = $region17
    $region16: #{mpu_forward.11} parent=1 // pred_region
      _
    $region17: #{mpu_forward.11} parent=1 // pred_fallthru
      _
    // Predicated region
    $region18: #{mpu_forward.11} parent=1 // pred_check
      _
    $region19: #{mpu_forward.11} parent=1 // pred_check_branch
      %26 = sbr.rel (0) target = $region21
    $region20: #{mpu_forward.11} parent=1 // pred_region
      _
    $region21: #{mpu_forward.11} parent=1 // pred_fallthru
      _
    // Predicated region
    $region22: #{mpu_forward.11} parent=1 // pred_check
      _
    $region23: #{mpu_forward.11} parent=1 // pred_check_branch
      %28 = sbr.rel (0) target = $region25
    $region24: #{mpu_forward.11} parent=1 // pred_region
      _
    $region25: #{mpu_forward.11} parent=1 // pred_fallthru
      _
    // Predicated region
    $region26: #{mpu_forward.11} parent=1 // pred_check
      _
    $region27: #{mpu_forward.11} parent=1 // pred_check_branch
      %30 = sbr.rel (0) target = $region29
    $region28: #{mpu_forward.11} parent=1 // pred_region
      _
    $region29: #{mpu_forward.11} parent=1 // pred_fallthru
      _
    // Predicated region
    $region30: #{mpu_forward.11} parent=1 // pred_check
      _
    $region31: #{mpu_forward.11} parent=1 // pred_check_branch
      %32 = sbr.rel (0) target = $region33
    $region32: #{mpu_forward.11} parent=1 // pred_region
      _
    $region33: #{mpu_forward.11} parent=1 // pred_fallthru
      _
    // Predicated region
    $region34: #{mpu_forward.11} parent=1 // pred_check
      _
    $region35: #{mpu_forward.11} parent=1 // pred_check_branch
      %34 = sbr.rel (0) target = $region37
    $region36: #{mpu_forward.11} parent=1 // pred_region
      _
    $region37: #{mpu_forward.11} parent=1 // pred_fallthru
      _
    // Predicated region
    $region38: #{mpu_forward.11} parent=1 // pred_check
      _
    $region39: #{mpu_forward.11} parent=1 // pred_check_branch
      %36 = sbr.rel (0) target = $region41
    $region40: #{mpu_forward.11} parent=1 // pred_region
      _
    $region41: #{mpu_forward.11} parent=1 // pred_fallthru
      _
    // Predicated region
    $region42: #{mpu_forward.11} parent=1 // pred_check
      _
    $region43: #{mpu_forward.11} parent=1 // pred_check_branch
      %38 = sbr.rel (0) target = $region45
    $region44: #{mpu_forward.11} parent=1 // pred_region
      _
    $region45: #{mpu_forward.11} parent=1 // pred_fallthru
      _
    %v40 = vld [vmem:[%s0] sm:$0xf]
    %v41 = vld [vmem:[%s0 + $0x4] sm:$0xf]
    %v42 = vld [vmem:[%s1] sm:$0xff]
    %v43 = vld [vmem:[%s1 + $0x8] sm:$0xff]
    %v44 = vld [vmem:[%s1 + $0x10] sm:$0xff]
    %v45 = vld [vmem:[%s1 + $0x18] sm:$0xff]
    %v46 = vpack.c.bf16 %v43, %v42
    %v47 = vpack.c.bf16 %v45, %v44
    %v48 = vld [vmem:[%s2] sm:$0x1]
    %v50 = vlaneseq
    %v51 = vshrl.u32 %v50, 7
    %v52 = vsub.s32 0, %v51
    %v53 = vrot.slane %v48, %v52
    %v57 = vunpack.c.l.b16 %v40
    %v58 = vunpack.c.l.b16 %v41
    %v59 = vpack.c.b16 %v58, %v57
    %vm60 = vcmask 261120
    %v62 = vsel %vm60, %v59, 0
    %64 = vmatprep.subr.bf16.mxu0 0
    %65 = vmatpush1.bf16.msra.mxu0 %v46
    %66 = vmatprep.subr.bf16.mxu0 0
    %67 = vmatpush1.bf16.msra.mxu0 %v47
    %68 = vmatprep.subr.bf16.mxu0 0
    %69 = vmatpush1.bf16.msra.mxu0 0
    %70 = vmatprep.subr.bf16.mxu0 0
    %71 = vmatpush1.bf16.msra.mxu0 0
    %72 = vmatprep.subr.bf16.mxu0 0
    %73 = vmatpush1.bf16.msra.mxu0 0
    %74 = vmatprep.subr.bf16.mxu0 0
    %75 = vmatpush1.bf16.msra.mxu0 0
    %76 = vmatprep.subr.bf16.mxu0 0
    %77 = vmatpush1.bf16.msra.mxu0 0
    %78 = vmatprep.subr.bf16.mxu0 0
    %79 = vmatpush1.bf16.msra.mxu0 0
    %80 = vmatprep.subr.bf16.mxu0 0
    %81 = vmatpush1.bf16.msra.mxu0 0
    %82 = vmatprep.subr.bf16.mxu0 0
    %83 = vmatpush1.bf16.msra.mxu0 0
    %84 = vmatprep.subr.bf16.mxu0 0
    %85 = vmatpush1.bf16.msra.mxu0 0
    %86 = vmatprep.subr.bf16.mxu0 0
    %87 = vmatpush1.bf16.msra.mxu0 0
    %88 = vmatprep.subr.bf16.mxu0 0
    %89 = vmatpush1.bf16.msra.mxu0 0
    %90 = vmatprep.subr.bf16.mxu0 0
    %91 = vmatpush1.bf16.msra.mxu0 0
    %92 = vmatprep.subr.bf16.mxu0 0
    %93 = vmatpush1.bf16.msra.mxu0 0
    %94 = vmatprep.subr.bf16.mxu0 0
    %95 = vmatpush1.bf16.msra.mxu0 0
    %96 = vmatprep.mubr.bf16.mxu0 0
    %97 = vmatmul.mubr.bf16.gmra.mrb[0].mxu0 %v62
    %v98 = vpop.f32.mrb[0].mxu0
    %v99 = vadd.f32 %v53, %v98
    %v100 = vpop.f32.mrb[0].mxu0
    %v101 = vpop.f32.mrb[0].mxu0
    %v102 = vadd.f32 %v53, %v101
    %v103 = vpop.f32.mrb[0].mxu0
    %104 = vdwg.mxu0
    %v105 = vld [vmem:[%s7] sm:$0x1]
    %v106 = vld [vmem:[%s8] sm:$0x1]
    %v107 = vsel %vm60, %v99, 0.0
    %108 = vadd.xlane.f32.xlu0 %v107
    %v109 = vpop.xlane.xlu0 %108
    %v110 = vsel %vm60, %v102, 0.0
    %111 = vadd.xlane.f32.xlu0 %v110
    %v112 = vpop.xlane.xlu0 %111
    %v113 = vrcp.pop 32.0
    %v114 = vmul.f32 %v109, %v113
    %v115 = vmul.f32 %v112, %v113
    %v116 = vsub.f32 %v99, %v114
    %v117 = vsub.f32 %v102, %v115
    %v118 = vmul.f32 %v116, %v116
    %v119 = vmul.f32 %v117, %v117
    %v120 = vsel %vm60, %v118, 0.0
    %121 = vadd.xlane.f32.xlu0 %v120
    %v122 = vpop.xlane.xlu0 %121
    %v123 = vsel %vm60, %v119, 0.0
    %124 = vadd.xlane.f32.xlu0 %v123
    %v125 = vpop.xlane.xlu0 %124
    %v126 = vmul.f32 %v122, %v113
    %v127 = vmul.f32 %v125, %v113
    %v128 = vadd.f32 %v126, 1e-05
    %v129 = vadd.f32 %v127, 1e-05
    %v130 = vrsqrt.pop %v128
    %v131 = vrsqrt.pop %v129
    %v132 = vmul.f32 %v116, %v130
    %v133 = vmul.f32 %v117, %v131
    %v135 = vlaneseq
    %v136 = vshrl.u32 %v135, 7
    %v137 = vsub.s32 0, %v136
    %v138 = vrot.slane %v105, %v137
    %v140 = vmul.f32 %v132, %v138
    %v141 = vmul.f32 %v133, %v138
    %v143 = vlaneseq
    %v144 = vshrl.u32 %v143, 7
    %v145 = vsub.s32 0, %v144
    %v146 = vrot.slane %v106, %v145
    %v148 = vadd.f32 %v140, %v146
    %v149 = vadd.f32 %v141, %v146
    %v150 = vpack.c.bf16 %v149, %v148
    %v151 = vld [vmem:[%s3] sm:$0xff]
    %v152 = vld [vmem:[%s3 + $0x8] sm:$0xff]
    %v153 = vld [vmem:[%s3 + $0x10] sm:$0xff]
    %v154 = vld [vmem:[%s3 + $0x18] sm:$0xff]
    %v155 = vpack.c.bf16 %v152, %v151
    %v156 = vpack.c.bf16 %v154, %v153
    %v157 = vld [vmem:[%s4] sm:$0x1]
    %v159 = vlaneseq
    %v160 = vshrl.u32 %v159, 7
    %v161 = vsub.s32 0, %v160
    %v162 = vrot.slane %v157, %v161
    %v165 = vsel %vm60, %v150, 0
    %167 = vmatprep.subr.bf16.mxu0 0
    %168 = vmatpush1.bf16.msra.mxu0 %v155
    %169 = vmatprep.subr.bf16.mxu0 0
    %170 = vmatpush1.bf16.msra.mxu0 %v156
    %171 = vmatprep.subr.bf16.mxu0 0
    %172 = vmatpush1.bf16.msra.mxu0 0
    %173 = vmatprep.subr.bf16.mxu0 0
    %174 = vmatpush1.bf16.msra.mxu0 0
    %175 = vmatprep.subr.bf16.mxu0 0
    %176 = vmatpush1.bf16.msra.mxu0 0
    %177 = vmatprep.subr.bf16.mxu0 0
    %178 = vmatpush1.bf16.msra.mxu0 0
    %179 = vmatprep.subr.bf16.mxu0 0
    %180 = vmatpush1.bf16.msra.mxu0 0
    %181 = vmatprep.subr.bf16.mxu0 0
    %182 = vmatpush1.bf16.msra.mxu0 0
    %183 = vmatprep.subr.bf16.mxu0 0
    %184 = vmatpush1.bf16.msra.mxu0 0
    %185 = vmatprep.subr.bf16.mxu0 0
    %186 = vmatpush1.bf16.msra.mxu0 0
    %187 = vmatprep.subr.bf16.mxu0 0
    %188 = vmatpush1.bf16.msra.mxu0 0
    %189 = vmatprep.subr.bf16.mxu0 0
    %190 = vmatpush1.bf16.msra.mxu0 0
    %191 = vmatprep.subr.bf16.mxu0 0
    %192 = vmatpush1.bf16.msra.mxu0 0
    %193 = vmatprep.subr.bf16.mxu0 0
    %194 = vmatpush1.bf16.msra.mxu0 0
    %195 = vmatprep.subr.bf16.mxu0 0
    %196 = vmatpush1.bf16.msra.mxu0 0
    %197 = vmatprep.subr.bf16.mxu0 0
    %198 = vmatpush1.bf16.msra.mxu0 0
    %199 = vmatprep.mubr.bf16.mxu0 0
    %200 = vmatmul.mubr.bf16.gmra.mrb[0].mxu0 %v165
    %v201 = vpop.f32.mrb[0].mxu0
    %v202 = vadd.f32 %v162, %v201
    %v203 = vpop.f32.mrb[0].mxu0
    %v204 = vpop.f32.mrb[0].mxu0
    %v205 = vadd.f32 %v162, %v204
    %v206 = vpop.f32.mrb[0].mxu0
    %207 = vdwg.mxu0
    %v208 = vmax.f32 %v202, 0.0
    %v209 = vmax.f32 %v205, 0.0
    %v210 = vpack.c.bf16 %v209, %v208
    %v211 = vld [vmem:[%s5] sm:$0xff]
    %v212 = vld [vmem:[%s5 + $0x8] sm:$0xff]
    %v213 = vld [vmem:[%s5 + $0x10] sm:$0xff]
    %v214 = vld [vmem:[%s5 + $0x18] sm:$0xff]
    %v215 = vld [vmem:[%s5 + $0x20] sm:$0xff]
    %v216 = vld [vmem:[%s5 + $0x28] sm:$0xff]
    %v217 = vld [vmem:[%s5 + $0x30] sm:$0xff]
    %v218 = vld [vmem:[%s5 + $0x38] sm:$0xff]
    %v219 = vld [vmem:[%s5 + $0x40] sm:$0xff]
    %v220 = vld [vmem:[%s5 + $0x48] sm:$0xff]
    %v221 = vld [vmem:[%s5 + $0x50] sm:$0xff]
    %v222 = vld [vmem:[%s5 + $0x58] sm:$0xff]
    %v223 = vld [vmem:[%s5 + $0x60] sm:$0xff]
    %v224 = vld [vmem:[%s5 + $0x68] sm:$0xff]
    %v225 = vld [vmem:[%s5 + $0x70] sm:$0xff]
    %v226 = vld [vmem:[%s5 + $0x78] sm:$0xff]
    %v227 = vpack.c.bf16 %v212, %v211
    %v228 = vpack.c.bf16 %v214, %v213
    %v229 = vpack.c.bf16 %v216, %v215
    %v230 = vpack.c.bf16 %v218, %v217
    %v231 = vpack.c.bf16 %v220, %v219
    %v232 = vpack.c.bf16 %v222, %v221
    %v233 = vpack.c.bf16 %v224, %v223
    %v234 = vpack.c.bf16 %v226, %v225
    %v235 = vld [vmem:[%s6] sm:$0x1]
    %v237 = vlaneseq
    %v238 = vshrl.u32 %v237, 7
    %v239 = vsub.s32 0, %v238
    %v240 = vrot.slane %v235, %v239
    %242 = vmatprep.subr.bf16.mxu0 0
    %243 = vmatpush1.bf16.msra.mxu0 %v227
    %244 = vmatprep.subr.bf16.mxu0 0
    %245 = vmatpush1.bf16.msra.mxu0 %v228
    %246 = vmatprep.subr.bf16.mxu0 0
    %247 = vmatpush1.bf16.msra.mxu0 %v229
    %248 = vmatprep.subr.bf16.mxu0 0
    %249 = vmatpush1.bf16.msra.mxu0 %v230
    %250 = vmatprep.subr.bf16.mxu0 0
    %251 = vmatpush1.bf16.msra.mxu0 %v231
    %252 = vmatprep.subr.bf16.mxu0 0
    %253 = vmatpush1.bf16.msra.mxu0 %v232
    %254 = vmatprep.subr.bf16.mxu0 0
    %255 = vmatpush1.bf16.msra.mxu0 %v233
    %256 = vmatprep.subr.bf16.mxu0 0
    %257 = vmatpush1.bf16.msra.mxu0 %v234
    %258 = vmatprep.subr.bf16.mxu0 0
    %259 = vmatpush1.bf16.msra.mxu0 0
    %260 = vmatprep.subr.bf16.mxu0 0
    %261 = vmatpush1.bf16.msra.mxu0 0
    %262 = vmatprep.subr.bf16.mxu0 0
    %263 = vmatpush1.bf16.msra.mxu0 0
    %264 = vmatprep.subr.bf16.mxu0 0
    %265 = vmatpush1.bf16.msra.mxu0 0
    %266 = vmatprep.subr.bf16.mxu0 0
    %267 = vmatpush1.bf16.msra.mxu0 0
    %268 = vmatprep.subr.bf16.mxu0 0
    %269 = vmatpush1.bf16.msra.mxu0 0
    %270 = vmatprep.subr.bf16.mxu0 0
    %271 = vmatpush1.bf16.msra.mxu0 0
    %272 = vmatprep.subr.bf16.mxu0 0
    %273 = vmatpush1.bf16.msra.mxu0 0
    %274 = vmatprep.mubr.bf16.mxu0 0
    %275 = vmatmul.mubr.bf16.gmra.mrb[0].mxu0 %v210
    %v276 = vpop.f32.mrb[0].mxu0
    %v277 = vadd.f32 %v240, %v276
    %v278 = vpop.f32.mrb[0].mxu0
    %v279 = vpop.f32.mrb[0].mxu0
    %v280 = vadd.f32 %v240, %v279
    %v281 = vpop.f32.mrb[0].mxu0
    %282 = vdwg.mxu0
    %v283 = vadd.f32 %v148, %v277
    %v284 = vadd.f32 %v149, %v280
    %v285 = vld [vmem:[%s9] sm:$0x1]
    %v286 = vld [vmem:[%s10] sm:$0x1]
    %v287 = vsel %vm60, %v283, 0.0
    %288 = vadd.xlane.f32.xlu0 %v287
    %v289 = vpop.xlane.xlu0 %288
    %v290 = vsel %vm60, %v284, 0.0
    %291 = vadd.xlane.f32.xlu0 %v290
    %v292 = vpop.xlane.xlu0 %291
    %v293 = vmul.f32 %v289, %v113
    %v294 = vmul.f32 %v292, %v113
    %v295 = vsub.f32 %v283, %v293
    %v296 = vsub.f32 %v284, %v294
    %v297 = vmul.f32 %v295, %v295
    %v298 = vmul.f32 %v296, %v296
    %v299 = vsel %vm60, %v297, 0.0
    %300 = vadd.xlane.f32.xlu0 %v299
    %v301 = vpop.xlane.xlu0 %300
    %v302 = vsel %vm60, %v298, 0.0
    %303 = vadd.xlane.f32.xlu0 %v302
    %v304 = vpop.xlane.xlu0 %303
    %v305 = vmul.f32 %v301, %v113
    %v306 = vmul.f32 %v304, %v113
    %v307 = vadd.f32 %v305, 1e-05
    %v308 = vadd.f32 %v306, 1e-05
    %v309 = vrsqrt.pop %v307
    %v310 = vrsqrt.pop %v308
    %v311 = vmul.f32 %v295, %v309
    %v312 = vmul.f32 %v296, %v310
    %v314 = vlaneseq
    %v315 = vshrl.u32 %v314, 7
    %v316 = vsub.s32 0, %v315
    %v317 = vrot.slane %v285, %v316
    %v319 = vmul.f32 %v311, %v317
    %v320 = vmul.f32 %v312, %v317
    %v322 = vlaneseq
    %v323 = vshrl.u32 %v322, 7
    %v324 = vsub.s32 0, %v323
    %v325 = vrot.slane %v286, %v324
    %v327 = vadd.f32 %v319, %v325
    %v328 = vadd.f32 %v320, %v325
    %329 = vst.msk [vmem:[#allocation2] sm:$0xff] %vm60, %v327
    %330 = vst.msk [vmem:[#allocation2 + $0x8] sm:$0xff] %vm60, %v328
    // Predicated region
    $region46: #{mpu_forward.11} parent=1 // pred_check
      _
    $region47: #{mpu_forward.11} parent=1 // pred_check_branch
      %332 = sbr.rel (0) target = $region49
    $region48: #{mpu_forward.11} parent=1 // pred_region
      %s334 = ssub.s32 256, 256
      %335 = vsyncadd [#allocation3], %s334
      %s336 = sshll.u32 [#allocation2], 4
      %s337 = int_to_ptr.vmem [resolvable:$true] %s336
      %342 = dma.vmem_to_hbm [thread:$0]  %s337, 256, %s11, [#allocation3], 128, 128, 8
    $region49: #{mpu_forward.11} parent=1 // pred_fallthru
      _
    // Predicated region
    $region50: #{mpu_forward.11} parent=1 // pred_check
      _
    $region51: #{mpu_forward.11} parent=1 // pred_check_branch
      %344 = sbr.rel (0) target = $region53
    $region52: #{mpu_forward.11} parent=1 // pred_region
      %345 = dma.done [#allocation3], 256
    $region53: #{mpu_forward.11} parent=1 // pred_fallthru
      _
    %346 = vsyncpa [#allocation3], 1

</llo_original>
